<compile_context>
chip_gen: v6e
topology: v6e:2x2x1
jax: 0.10.0
libtpu: 0.0.40
codegen_flags: <defaults>
</compile_context>

<pallas_src>
import functools

import jax
import jax.numpy as jnp
from jax import lax
from jax.experimental import pallas as pl
from jax.experimental.pallas import tpu as pltpu


_ISSUE_UNROLL = 8  # DMA-issue unroll; block_tokens is always a multiple of 8.


def _row_copy(word_hbm, wbuf, sems, src_row, dst_row, slot):
    """(1, dim) async copy: word_table[src_row] (HBM) -> wbuf[dst_row] (VMEM)."""
    return pltpu.make_async_copy(
        word_hbm.at[pl.ds(src_row, 1), :],
        wbuf.at[pl.ds(dst_row, 1), :],
        sems.at[slot],
    )


def _block_wait_copy(word_hbm, wbuf, sems, slot, block_tokens):
    """Descriptor covering block_tokens x (1, dim) bytes; used only for the
    single sized wait (one wait balances block_tokens row-copy completions)."""
    return pltpu.make_async_copy(
        word_hbm.at[pl.ds(0, block_tokens), :],
        wbuf.at[pl.ds(slot * block_tokens, block_tokens), :],
        sems.at[slot],
    )


def _embeddings_kernel(ids_ref, word_hbm, pos_ref, gamma_ref, beta_ref,
                       out_ref, wbuf, sems, *,
                       block_tokens, blocks_per_seq, n_blocks, eps):
    i = pl.program_id(0)

    def start_gather(block_idx, slot):
        tok_base = block_idx * block_tokens
        row_base = slot * block_tokens

        @pl.loop(0, block_tokens // _ISSUE_UNROLL)
        def _(g):
            base = g * _ISSUE_UNROLL
            # Hoist the SMEM id loads ahead of the starts so scalar reads
            # co-issue with DMA-descriptor construction.
            toks = [ids_ref[tok_base + base + u] for u in range(_ISSUE_UNROLL)]
            for u in range(_ISSUE_UNROLL):
                _row_copy(word_hbm, wbuf, sems,
                          toks[u], row_base + base + u, slot).start()

    slot = i % 3

    # Prime the 3-deep pipeline on the first step.
    @pl.when(i == 0)
    def _():
        start_gather(0, 0)
        if n_blocks > 1:            # static (trace-time) condition
            start_gather(1, 1)

    # Prefetch block i+2; overlaps with this block's wait + LayerNorm +
    # output writeback.  Scalar id reads happen before the wait below
    # (preserves SMEM sst->sld forwarding).
    @pl.when(i + 2 < n_blocks)
    def _():
        start_gather(i + 2, (i + 2) % 3)

    # Single sized wait for this block's gathered rows (DMA sems count bytes;
    # this descriptor's byte count equals block_tokens row copies of (1, dim)).
    _block_wait_copy(word_hbm, wbuf, sems, slot, block_tokens).wait()

    row0 = pl.multiple_of(slot * block_tokens, block_tokens)
    we = wbuf[pl.ds(row0, block_tokens), :].astype(jnp.float32)        # (T, dim)

    pos_off = pl.multiple_of((i % blocks_per_seq) * block_tokens, block_tokens)
    pe = pos_ref[pl.ds(pos_off, block_tokens), :].astype(jnp.float32)  # (T, dim)

    x = we + pe

    # LayerNorm over the hidden axis: biased variance, eps inside rsqrt
    # (matches torch.nn.LayerNorm).  sum * (1/dim) so the scale constant-folds.
    inv_dim = 1.0 / x.shape[-1]
    mean = jnp.sum(x, axis=-1, keepdims=True) * inv_dim
    xc = x - mean
    var = jnp.sum(xc * xc, axis=-1, keepdims=True) * inv_dim
    inv = lax.rsqrt(var + eps)
    y = xc * inv * gamma_ref[...].astype(jnp.float32) \
        + beta_ref[...].astype(jnp.float32)

    # Dropout: identity in eval mode.
    out_ref[...] = y.astype(out_ref.dtype)


def _pick_block_tokens(seq_pad, target=512):
    """Largest multiple-of-8 divisor of seq_pad that is <= target."""
    best = 8
    for t in range(8, min(seq_pad, target) + 1, 8):
        if seq_pad % t == 0:
            best = t
    return best


def embeddings_forward(input_ids, word_table, pos_table, gamma, beta,
                       *, eps=1e-12, block_tokens=None):
    """input_ids: (bs, seq) int32 -> (bs, seq, dim) in word_table.dtype."""
    bs, seq = input_ids.shape
    vocab, dim = word_table.shape
    max_pos = pos_table.shape[0]

    # Pad the sequence axis to a multiple of 8 so the (T, dim) output block is
    # always legal (divisible-by-8 sublane dim); padded rows are sliced away.
    seq_pad = ((seq + 7) // 8) * 8
    if block_tokens is None:
        block_tokens = _pick_block_tokens(seq_pad)
    assert block_tokens % 8 == 0 and seq_pad % block_tokens == 0
    assert vocab >= block_tokens, "sized-wait descriptor needs vocab >= block_tokens"

    ids = input_ids.astype(jnp.int32)
    if seq_pad != seq:
        ids = jnp.pad(ids, ((0, 0), (0, seq_pad - seq)))   # pad with id 0 (valid row)
    if max_pos < seq_pad:                                   # cover padded positions
        pos_table = jnp.pad(pos_table, ((0, seq_pad - max_pos), (0, 0)))
    pos_rows = pos_table.shape[0]

    n_tok = bs * seq_pad
    n_blocks = n_tok // block_tokens
    blocks_per_seq = seq_pad // block_tokens

    ids_flat = ids.reshape(-1)                 # (bs*seq_pad,) -> SMEM
    # TODO(synk): for very large bs*seq the scalar-prefetched id vector should
    # be chunked (kept in HBM, DMA'd per block) to avoid SMEM overflow.

    gamma2 = gamma.reshape(1, dim)
    beta2 = beta.reshape(1, dim)
    out_dtype = word_table.dtype

    wt_isz = jnp.dtype(word_table.dtype).itemsize
    working_set = (3 * block_tokens * dim * wt_isz                      # gather buf
                   + pos_rows * dim * jnp.dtype(pos_table.dtype).itemsize
                   + 2 * block_tokens * dim * jnp.dtype(out_dtype).itemsize
                   + 4 * dim * 4)                                       # gamma/beta
    vmem_limit = int(min(max(2 * working_set, 32 << 20), 64 << 20))     # v7x-safe cap

    grid_spec = pltpu.PrefetchScalarGridSpec(
        num_scalar_prefetch=1,          # ids_flat -> SMEM (also fed to index_maps)
        grid=(n_blocks,),
        in_specs=[
            # Word table stays in HBM; rows gathered with manual DMAs.
            pl.BlockSpec(memory_space=pl.ANY),
            # Full position table, VMEM-resident (constant block index ->
            # loaded once); rows sliced in-kernel.
            pl.BlockSpec((pos_rows, dim), lambda i, ids: (0, 0)),
            # LayerNorm weight / bias (tiny resident blocks).
            pl.BlockSpec((1, dim), lambda i, ids: (0, 0)),
            pl.BlockSpec((1, dim), lambda i, ids: (0, 0)),
        ],
        out_specs=pl.BlockSpec((block_tokens, dim), lambda i, ids: (i, 0)),
        scratch_shapes=[
            # 3-deep gather pipeline: rows [slot*T, slot*T + T).
            pltpu.VMEM((3 * block_tokens, dim), word_table.dtype),
            pltpu.SemaphoreType.DMA((3,)),
        ],
    )

    out_flat = pl.pallas_call(
        functools.partial(_embeddings_kernel,
                          block_tokens=block_tokens,
                          blocks_per_seq=blocks_per_seq,
                          n_blocks=n_blocks,
                          eps=eps),
        out_shape=jax.ShapeDtypeStruct((n_tok, dim), out_dtype),
        grid_spec=grid_spec,
        compiler_params=pltpu.CompilerParams(
            # "arbitrary" is required: the multi-buffered gather carries DMA
            # state across consecutive grid steps.
            dimension_semantics=("arbitrary",),
            vmem_limit_bytes=vmem_limit),
    )(ids_flat, word_table, pos_table, gamma2, beta2)

    out = out_flat.reshape(bs, seq_pad, dim)
    if seq_pad != seq:
        out = out[:, :seq, :]
    return out


def _reference(input_ids, word_table, pos_table, gamma, beta, eps=1e-12):
    bs, seq = input_ids.shape
    we = word_table[input_ids]                        # (bs, seq, dim)
    pe = pos_table[jnp.arange(seq)][None, :, :]       # (1, seq, dim)
    x = (we + pe).astype(jnp.float32)
    mean = jnp.mean(x, axis=-1, keepdims=True)
    var = jnp.mean((x - mean) ** 2, axis=-1, keepdims=True)
    return (x - mean) * lax.rsqrt(var + eps) * gamma + beta


if __name__ == "__main__":
    # Small synthetic config (consistent with the module's __init__); dim kept
    # lane-dense (128) so the output store path is unmasked.
    vocab_size = 64
    dim = 128
    max_position_embeddings = 16
    pad_token_id = 0
    bs, seq = 2, 8

    key = jax.random.PRNGKey(0)
    k_ids, k_word, k_pos = jax.random.split(key, 3)

    input_ids = jax.random.randint(k_ids, (bs, seq), 0, vocab_size,
                                   dtype=jnp.int32)

    # nn.Embedding init ~ N(0, 1); padding_idx row zeroed (as PyTorch does).
    word_table = jax.random.normal(k_word, (vocab_size, dim), dtype=jnp.float32)
    word_table = word_table.at[pad_token_id].set(0.0)
    pos_table = jax.random.normal(k_pos, (max_position_embeddings, dim),
                                  dtype=jnp.float32)

    # nn.LayerNorm init: weight=1, bias=0 (standard LayerNorm branch, bcos=False).
    gamma = jnp.ones((dim,), dtype=jnp.float32)
    beta = jnp.zeros((dim,), dtype=jnp.float32)

    out = embeddings_forward(input_ids, word_table, pos_table, gamma, beta)
    out = jax.block_until_ready(out)

    ref = _reference(input_ids, word_table, pos_table, gamma, beta)
    assert out.shape == (bs, seq, dim)
    assert jnp.allclose(out, ref, atol=1e-5, rtol=1e-5), "mismatch vs reference"

    print("KERNEL_OK")
</pallas_src>

<mosaic_0001>
module attributes {stable_mosaic.version = 11 : i64} {
  func.func @_embeddings_kernel(%arg0: i32, %arg1: memref<16xi32, #tpu.memory_space<smem>>, %arg2: memref<64x128xf32, #tpu.memory_space<any>>, %arg3: memref<16x128xf32, #tpu.memory_space<vmem>>, %arg4: memref<1x128xf32, #tpu.memory_space<vmem>>, %arg5: memref<1x128xf32, #tpu.memory_space<vmem>>, %arg6: memref<8x128xf32, #tpu.memory_space<vmem>>, %arg7: memref<24x128xf32, #tpu.memory_space<vmem>>, %arg8: memref<3x!tpu.dma_semaphore, #tpu.memory_space<semaphore_mem>>) attributes {dimension_semantics = [#tpu.dimension_semantics<arbitrary>], iteration_bounds = array<i64: 2>, scalar_prefetch = 1 : i64, scratch_operands = 2 : i64, tpu.core_type = #tpu.core_type<tc>, window_params = [{}, {pipeline_mode = #tpu.pipeline_mode<synchronous>, transform_indices = @transform_1, window_bounds = array<i64: 16, 128>}, {pipeline_mode = #tpu.pipeline_mode<synchronous>, transform_indices = @transform_2, window_bounds = array<i64: 1, 128>}, {pipeline_mode = #tpu.pipeline_mode<synchronous>, transform_indices = @transform_3, window_bounds = array<i64: 1, 128>}, {transform_indices = @transform_4, window_bounds = array<i64: 8, 128>}]} {
    %c3_i32 = arith.constant 3 : i32
    %c0_i32 = arith.constant 0 : i32
    %0 = arith.cmpi eq, %c3_i32, %c0_i32 : i32
    %c1_i32 = arith.constant 1 : i32
    %1 = arith.select %0, %c1_i32, %c3_i32 : i32
    %2 = arith.remsi %arg0, %1 : i32
    %c0_i32_0 = arith.constant 0 : i32
    %3 = arith.cmpi ne, %2, %c0_i32_0 : i32
    %c0_i32_1 = arith.constant 0 : i32
    %4 = arith.cmpi slt, %2, %c0_i32_1 : i32
    %c0_i32_2 = arith.constant 0 : i32
    %5 = arith.cmpi slt, %1, %c0_i32_2 : i32
    %6 = arith.xori %4, %5 : i1
    %7 = arith.andi %6, %3 : i1
    %8 = arith.addi %2, %1 : i32
    %9 = arith.select %7, %8, %2 : i32
    %c0_i32_3 = arith.constant 0 : i32
    %10 = arith.cmpi eq, %arg0, %c0_i32_3 : i32
    %11 = arith.extui %10 : i1 to i32
    %c0_i32_4 = arith.constant 0 : i32
    %12 = arith.cmpi ne, %11, %c0_i32_4 : i32
    scf.if %12 {
      %c0_i32_29 = arith.constant 0 : i32
      %c1_i32_30 = arith.constant 1 : i32
      %64 = arith.muli %c0_i32_29, %c1_i32_30 : i32
      %c0_i32_31 = arith.constant 0 : i32
      %65 = arith.addi %c0_i32_31, %64 : i32
      %c8_i32_32 = arith.constant 8 : i32
      %66 = arith.muli %65, %c8_i32_32 : i32
      %c0_i32_33 = arith.constant 0 : i32
      %67 = arith.addi %c0_i32_33, %66 : i32
      %c0_i32_34 = arith.constant 0 : i32
      %68 = arith.addi %67, %c0_i32_34 : i32
      %69 = arith.index_cast %68 : i32 to index
      %70 = memref.load %arg1[%69] : memref<16xi32, #tpu.memory_space<smem>>
      %c0_i32_35 = arith.constant 0 : i32
      %71 = arith.addi %c0_i32_35, %66 : i32
      %c1_i32_36 = arith.constant 1 : i32
      %72 = arith.addi %71, %c1_i32_36 : i32
      %73 = arith.index_cast %72 : i32 to index
      %74 = memref.load %arg1[%73] : memref<16xi32, #tpu.memory_space<smem>>
      %c0_i32_37 = arith.constant 0 : i32
      %75 = arith.addi %c0_i32_37, %66 : i32
      %c2_i32_38 = arith.constant 2 : i32
      %76 = arith.addi %75, %c2_i32_38 : i32
      %77 = arith.index_cast %76 : i32 to index
      %78 = memref.load %arg1[%77] : memref<16xi32, #tpu.memory_space<smem>>
      %c0_i32_39 = arith.constant 0 : i32
      %79 = arith.addi %c0_i32_39, %66 : i32
      %c3_i32_40 = arith.constant 3 : i32
      %80 = arith.addi %79, %c3_i32_40 : i32
      %81 = arith.index_cast %80 : i32 to index
      %82 = memref.load %arg1[%81] : memref<16xi32, #tpu.memory_space<smem>>
      %c0_i32_41 = arith.constant 0 : i32
      %83 = arith.addi %c0_i32_41, %66 : i32
      %c4_i32 = arith.constant 4 : i32
      %84 = arith.addi %83, %c4_i32 : i32
      %85 = arith.index_cast %84 : i32 to index
      %86 = memref.load %arg1[%85] : memref<16xi32, #tpu.memory_space<smem>>
      %c0_i32_42 = arith.constant 0 : i32
      %87 = arith.addi %c0_i32_42, %66 : i32
      %c5_i32 = arith.constant 5 : i32
      %88 = arith.addi %87, %c5_i32 : i32
      %89 = arith.index_cast %88 : i32 to index
      %90 = memref.load %arg1[%89] : memref<16xi32, #tpu.memory_space<smem>>
      %c0_i32_43 = arith.constant 0 : i32
      %91 = arith.addi %c0_i32_43, %66 : i32
      %c6_i32 = arith.constant 6 : i32
      %92 = arith.addi %91, %c6_i32 : i32
      %93 = arith.index_cast %92 : i32 to index
      %94 = memref.load %arg1[%93] : memref<16xi32, #tpu.memory_space<smem>>
      %c0_i32_44 = arith.constant 0 : i32
      %95 = arith.addi %c0_i32_44, %66 : i32
      %c7_i32 = arith.constant 7 : i32
      %96 = arith.addi %95, %c7_i32 : i32
      %97 = arith.index_cast %96 : i32 to index
      %98 = memref.load %arg1[%97] : memref<16xi32, #tpu.memory_space<smem>>
      %c0_i32_45 = arith.constant 0 : i32
      %99 = arith.addi %c0_i32_45, %66 : i32
      %c0_i32_46 = arith.constant 0 : i32
      %100 = arith.addi %99, %c0_i32_46 : i32
      %c0_i32_47 = arith.constant 0 : i32
      %c0_i32_48 = arith.constant 0 : i32
      %101 = tpu.memref_slice %arg2[%70, %c0_i32_48] : memref<64x128xf32, #tpu.memory_space<any>> -> memref<1x128xf32, #tpu.memory_space<any>>
      %c0_i32_49 = arith.constant 0 : i32
      %102 = tpu.memref_slice %arg7[%100, %c0_i32_49] : memref<24x128xf32, #tpu.memory_space<vmem>> -> memref<1x128xf32, #tpu.memory_space<vmem>>
      %103 = tpu.memref_slice %arg8[%c0_i32_47] : memref<3x!tpu.dma_semaphore, #tpu.memory_space<semaphore_mem>> -> memref<1x!tpu.dma_semaphore, #tpu.memory_space<semaphore_mem>>
      %104 = tpu.memref_squeeze %103 : memref<1x!tpu.dma_semaphore, #tpu.memory_space<semaphore_mem>> -> memref<!tpu.dma_semaphore, #tpu.memory_space<semaphore_mem>>
      tpu.enqueue_dma source(%101 : memref<1x128xf32, #tpu.memory_space<any>>) target(%102 : memref<1x128xf32, #tpu.memory_space<vmem>>) target_semaphore(%104 : memref<!tpu.dma_semaphore, #tpu.memory_space<semaphore_mem>>)
      %c0_i32_50 = arith.constant 0 : i32
      %105 = arith.addi %c0_i32_50, %66 : i32
      %c1_i32_51 = arith.constant 1 : i32
      %106 = arith.addi %105, %c1_i32_51 : i32
      %c0_i32_52 = arith.constant 0 : i32
      %c0_i32_53 = arith.constant 0 : i32
      %107 = tpu.memref_slice %arg2[%74, %c0_i32_53] : memref<64x128xf32, #tpu.memory_space<any>> -> memref<1x128xf32, #tpu.memory_space<any>>
      %c0_i32_54 = arith.constant 0 : i32
      %108 = tpu.memref_slice %arg7[%106, %c0_i32_54] : memref<24x128xf32, #tpu.memory_space<vmem>> -> memref<1x128xf32, #tpu.memory_space<vmem>>
      %109 = tpu.memref_slice %arg8[%c0_i32_52] : memref<3x!tpu.dma_semaphore, #tpu.memory_space<semaphore_mem>> -> memref<1x!tpu.dma_semaphore, #tpu.memory_space<semaphore_mem>>
      %110 = tpu.memref_squeeze %109 : memref<1x!tpu.dma_semaphore, #tpu.memory_space<semaphore_mem>> -> memref<!tpu.dma_semaphore, #tpu.memory_space<semaphore_mem>>
      tpu.enqueue_dma source(%107 : memref<1x128xf32, #tpu.memory_space<any>>) target(%108 : memref<1x128xf32, #tpu.memory_space<vmem>>) target_semaphore(%110 : memref<!tpu.dma_semaphore, #tpu.memory_space<semaphore_mem>>)
      %c0_i32_55 = arith.constant 0 : i32
      %111 = arith.addi %c0_i32_55, %66 : i32
      %c2_i32_56 = arith.constant 2 : i32
      %112 = arith.addi %111, %c2_i32_56 : i32
      %c0_i32_57 = arith.constant 0 : i32
      %c0_i32_58 = arith.constant 0 : i32
      %113 = tpu.memref_slice %arg2[%78, %c0_i32_58] : memref<64x128xf32, #tpu.memory_space<any>> -> memref<1x128xf32, #tpu.memory_space<any>>
      %c0_i32_59 = arith.constant 0 : i32
      %114 = tpu.memref_slice %arg7[%112, %c0_i32_59] : memref<24x128xf32, #tpu.memory_space<vmem>> -> memref<1x128xf32, #tpu.memory_space<vmem>>
      %115 = tpu.memref_slice %arg8[%c0_i32_57] : memref<3x!tpu.dma_semaphore, #tpu.memory_space<semaphore_mem>> -> memref<1x!tpu.dma_semaphore, #tpu.memory_space<semaphore_mem>>
      %116 = tpu.memref_squeeze %115 : memref<1x!tpu.dma_semaphore, #tpu.memory_space<semaphore_mem>> -> memref<!tpu.dma_semaphore, #tpu.memory_space<semaphore_mem>>
      tpu.enqueue_dma source(%113 : memref<1x128xf32, #tpu.memory_space<any>>) target(%114 : memref<1x128xf32, #tpu.memory_space<vmem>>) target_semaphore(%116 : memref<!tpu.dma_semaphore, #tpu.memory_space<semaphore_mem>>)
      %c0_i32_60 = arith.constant 0 : i32
      %117 = arith.addi %c0_i32_60, %66 : i32
      %c3_i32_61 = arith.constant 3 : i32
      %118 = arith.addi %117, %c3_i32_61 : i32
      %c0_i32_62 = arith.constant 0 : i32
      %c0_i32_63 = arith.constant 0 : i32
      %119 = tpu.memref_slice %arg2[%82, %c0_i32_63] : memref<64x128xf32, #tpu.memory_space<any>> -> memref<1x128xf32, #tpu.memory_space<any>>
      %c0_i32_64 = arith.constant 0 : i32
      %120 = tpu.memref_slice %arg7[%118, %c0_i32_64] : memref<24x128xf32, #tpu.memory_space<vmem>> -> memref<1x128xf32, #tpu.memory_space<vmem>>
      %121 = tpu.memref_slice %arg8[%c0_i32_62] : memref<3x!tpu.dma_semaphore, #tpu.memory_space<semaphore_mem>> -> memref<1x!tpu.dma_semaphore, #tpu.memory_space<semaphore_mem>>
      %122 = tpu.memref_squeeze %121 : memref<1x!tpu.dma_semaphore, #tpu.memory_space<semaphore_mem>> -> memref<!tpu.dma_semaphore, #tpu.memory_space<semaphore_mem>>
      tpu.enqueue_dma source(%119 : memref<1x128xf32, #tpu.memory_space<any>>) target(%120 : memref<1x128xf32, #tpu.memory_space<vmem>>) target_semaphore(%122 : memref<!tpu.dma_semaphore, #tpu.memory_space<semaphore_mem>>)
      %c0_i32_65 = arith.constant 0 : i32
      %123 = arith.addi %c0_i32_65, %66 : i32
      %c4_i32_66 = arith.constant 4 : i32
      %124 = arith.addi %123, %c4_i32_66 : i32
      %c0_i32_67 = arith.constant 0 : i32
      %c0_i32_68 = arith.constant 0 : i32
      %125 = tpu.memref_slice %arg2[%86, %c0_i32_68] : memref<64x128xf32, #tpu.memory_space<any>> -> memref<1x128xf32, #tpu.memory_space<any>>
      %c0_i32_69 = arith.constant 0 : i32
      %126 = tpu.memref_slice %arg7[%124, %c0_i32_69] : memref<24x128xf32, #tpu.memory_space<vmem>> -> memref<1x128xf32, #tpu.memory_space<vmem>>
      %127 = tpu.memref_slice %arg8[%c0_i32_67] : memref<3x!tpu.dma_semaphore, #tpu.memory_space<semaphore_mem>> -> memref<1x!tpu.dma_semaphore, #tpu.memory_space<semaphore_mem>>
      %128 = tpu.memref_squeeze %127 : memref<1x!tpu.dma_semaphore, #tpu.memory_space<semaphore_mem>> -> memref<!tpu.dma_semaphore, #tpu.memory_space<semaphore_mem>>
      tpu.enqueue_dma source(%125 : memref<1x128xf32, #tpu.memory_space<any>>) target(%126 : memref<1x128xf32, #tpu.memory_space<vmem>>) target_semaphore(%128 : memref<!tpu.dma_semaphore, #tpu.memory_space<semaphore_mem>>)
      %c0_i32_70 = arith.constant 0 : i32
      %129 = arith.addi %c0_i32_70, %66 : i32
      %c5_i32_71 = arith.constant 5 : i32
      %130 = arith.addi %129, %c5_i32_71 : i32
      %c0_i32_72 = arith.constant 0 : i32
      %c0_i32_73 = arith.constant 0 : i32
      %131 = tpu.memref_slice %arg2[%90, %c0_i32_73] : memref<64x128xf32, #tpu.memory_space<any>> -> memref<1x128xf32, #tpu.memory_space<any>>
      %c0_i32_74 = arith.constant 0 : i32
      %132 = tpu.memref_slice %arg7[%130, %c0_i32_74] : memref<24x128xf32, #tpu.memory_space<vmem>> -> memref<1x128xf32, #tpu.memory_space<vmem>>
      %133 = tpu.memref_slice %arg8[%c0_i32_72] : memref<3x!tpu.dma_semaphore, #tpu.memory_space<semaphore_mem>> -> memref<1x!tpu.dma_semaphore, #tpu.memory_space<semaphore_mem>>
      %134 = tpu.memref_squeeze %133 : memref<1x!tpu.dma_semaphore, #tpu.memory_space<semaphore_mem>> -> memref<!tpu.dma_semaphore, #tpu.memory_space<semaphore_mem>>
      tpu.enqueue_dma source(%131 : memref<1x128xf32, #tpu.memory_space<any>>) target(%132 : memref<1x128xf32, #tpu.memory_space<vmem>>) target_semaphore(%134 : memref<!tpu.dma_semaphore, #tpu.memory_space<semaphore_mem>>)
      %c0_i32_75 = arith.constant 0 : i32
      %135 = arith.addi %c0_i32_75, %66 : i32
      %c6_i32_76 = arith.constant 6 : i32
      %136 = arith.addi %135, %c6_i32_76 : i32
      %c0_i32_77 = arith.constant 0 : i32
      %c0_i32_78 = arith.constant 0 : i32
      %137 = tpu.memref_slice %arg2[%94, %c0_i32_78] : memref<64x128xf32, #tpu.memory_space<any>> -> memref<1x128xf32, #tpu.memory_space<any>>
      %c0_i32_79 = arith.constant 0 : i32
      %138 = tpu.memref_slice %arg7[%136, %c0_i32_79] : memref<24x128xf32, #tpu.memory_space<vmem>> -> memref<1x128xf32, #tpu.memory_space<vmem>>
      %139 = tpu.memref_slice %arg8[%c0_i32_77] : memref<3x!tpu.dma_semaphore, #tpu.memory_space<semaphore_mem>> -> memref<1x!tpu.dma_semaphore, #tpu.memory_space<semaphore_mem>>
      %140 = tpu.memref_squeeze %139 : memref<1x!tpu.dma_semaphore, #tpu.memory_space<semaphore_mem>> -> memref<!tpu.dma_semaphore, #tpu.memory_space<semaphore_mem>>
      tpu.enqueue_dma source(%137 : memref<1x128xf32, #tpu.memory_space<any>>) target(%138 : memref<1x128xf32, #tpu.memory_space<vmem>>) target_semaphore(%140 : memref<!tpu.dma_semaphore, #tpu.memory_space<semaphore_mem>>)
      %c0_i32_80 = arith.constant 0 : i32
      %141 = arith.addi %c0_i32_80, %66 : i32
      %c7_i32_81 = arith.constant 7 : i32
      %142 = arith.addi %141, %c7_i32_81 : i32
      %c0_i32_82 = arith.constant 0 : i32
      %c0_i32_83 = arith.constant 0 : i32
      %143 = tpu.memref_slice %arg2[%98, %c0_i32_83] : memref<64x128xf32, #tpu.memory_space<any>> -> memref<1x128xf32, #tpu.memory_space<any>>
      %c0_i32_84 = arith.constant 0 : i32
      %144 = tpu.memref_slice %arg7[%142, %c0_i32_84] : memref<24x128xf32, #tpu.memory_space<vmem>> -> memref<1x128xf32, #tpu.memory_space<vmem>>
      %145 = tpu.memref_slice %arg8[%c0_i32_82] : memref<3x!tpu.dma_semaphore, #tpu.memory_space<semaphore_mem>> -> memref<1x!tpu.dma_semaphore, #tpu.memory_space<semaphore_mem>>
      %146 = tpu.memref_squeeze %145 : memref<1x!tpu.dma_semaphore, #tpu.memory_space<semaphore_mem>> -> memref<!tpu.dma_semaphore, #tpu.memory_space<semaphore_mem>>
      tpu.enqueue_dma source(%143 : memref<1x128xf32, #tpu.memory_space<any>>) target(%144 : memref<1x128xf32, #tpu.memory_space<vmem>>) target_semaphore(%146 : memref<!tpu.dma_semaphore, #tpu.memory_space<semaphore_mem>>)
      %c1_i32_85 = arith.constant 1 : i32
      %c0_i32_86 = arith.constant 0 : i32
      %c1_i32_87 = arith.constant 1 : i32
      %147 = arith.muli %c0_i32_86, %c1_i32_87 : i32
      %c0_i32_88 = arith.constant 0 : i32
      %148 = arith.addi %c0_i32_88, %147 : i32
      %c8_i32_89 = arith.constant 8 : i32
      %149 = arith.muli %148, %c8_i32_89 : i32
      %c8_i32_90 = arith.constant 8 : i32
      %150 = arith.addi %c8_i32_90, %149 : i32
      %c0_i32_91 = arith.constant 0 : i32
      %151 = arith.addi %150, %c0_i32_91 : i32
      %152 = arith.index_cast %151 : i32 to index
      %153 = memref.load %arg1[%152] : memref<16xi32, #tpu.memory_space<smem>>
      %c8_i32_92 = arith.constant 8 : i32
      %154 = arith.addi %c8_i32_92, %149 : i32
      %c1_i32_93 = arith.constant 1 : i32
      %155 = arith.addi %154, %c1_i32_93 : i32
      %156 = arith.index_cast %155 : i32 to index
      %157 = memref.load %arg1[%156] : memref<16xi32, #tpu.memory_space<smem>>
      %c8_i32_94 = arith.constant 8 : i32
      %158 = arith.addi %c8_i32_94, %149 : i32
      %c2_i32_95 = arith.constant 2 : i32
      %159 = arith.addi %158, %c2_i32_95 : i32
      %160 = arith.index_cast %159 : i32 to index
      %161 = memref.load %arg1[%160] : memref<16xi32, #tpu.memory_space<smem>>
      %c8_i32_96 = arith.constant 8 : i32
      %162 = arith.addi %c8_i32_96, %149 : i32
      %c3_i32_97 = arith.constant 3 : i32
      %163 = arith.addi %162, %c3_i32_97 : i32
      %164 = arith.index_cast %163 : i32 to index
      %165 = memref.load %arg1[%164] : memref<16xi32, #tpu.memory_space<smem>>
      %c8_i32_98 = arith.constant 8 : i32
      %166 = arith.addi %c8_i32_98, %149 : i32
      %c4_i32_99 = arith.constant 4 : i32
      %167 = arith.addi %166, %c4_i32_99 : i32
      %168 = arith.index_cast %167 : i32 to index
      %169 = memref.load %arg1[%168] : memref<16xi32, #tpu.memory_space<smem>>
      %c8_i32_100 = arith.constant 8 : i32
      %170 = arith.addi %c8_i32_100, %149 : i32
      %c5_i32_101 = arith.constant 5 : i32
      %171 = arith.addi %170, %c5_i32_101 : i32
      %172 = arith.index_cast %171 : i32 to index
      %173 = memref.load %arg1[%172] : memref<16xi32, #tpu.memory_space<smem>>
      %c8_i32_102 = arith.constant 8 : i32
      %174 = arith.addi %c8_i32_102, %149 : i32
      %c6_i32_103 = arith.constant 6 : i32
      %175 = arith.addi %174, %c6_i32_103 : i32
      %176 = arith.index_cast %175 : i32 to index
      %177 = memref.load %arg1[%176] : memref<16xi32, #tpu.memory_space<smem>>
      %c8_i32_104 = arith.constant 8 : i32
      %178 = arith.addi %c8_i32_104, %149 : i32
      %c7_i32_105 = arith.constant 7 : i32
      %179 = arith.addi %178, %c7_i32_105 : i32
      %180 = arith.index_cast %179 : i32 to index
      %181 = memref.load %arg1[%180] : memref<16xi32, #tpu.memory_space<smem>>
      %c8_i32_106 = arith.constant 8 : i32
      %182 = arith.addi %c8_i32_106, %149 : i32
      %c0_i32_107 = arith.constant 0 : i32
      %183 = arith.addi %182, %c0_i32_107 : i32
      %c1_i32_108 = arith.constant 1 : i32
      %c0_i32_109 = arith.constant 0 : i32
      %184 = tpu.memref_slice %arg2[%153, %c0_i32_109] : memref<64x128xf32, #tpu.memory_space<any>> -> memref<1x128xf32, #tpu.memory_space<any>>
      %c0_i32_110 = arith.constant 0 : i32
      %185 = tpu.memref_slice %arg7[%183, %c0_i32_110] : memref<24x128xf32, #tpu.memory_space<vmem>> -> memref<1x128xf32, #tpu.memory_space<vmem>>
      %186 = tpu.memref_slice %arg8[%c1_i32_108] : memref<3x!tpu.dma_semaphore, #tpu.memory_space<semaphore_mem>> -> memref<1x!tpu.dma_semaphore, #tpu.memory_space<semaphore_mem>>
      %187 = tpu.memref_squeeze %186 : memref<1x!tpu.dma_semaphore, #tpu.memory_space<semaphore_mem>> -> memref<!tpu.dma_semaphore, #tpu.memory_space<semaphore_mem>>
      tpu.enqueue_dma source(%184 : memref<1x128xf32, #tpu.memory_space<any>>) target(%185 : memref<1x128xf32, #tpu.memory_space<vmem>>) target_semaphore(%187 : memref<!tpu.dma_semaphore, #tpu.memory_space<semaphore_mem>>)
      %c8_i32_111 = arith.constant 8 : i32
      %188 = arith.addi %c8_i32_111, %149 : i32
      %c1_i32_112 = arith.constant 1 : i32
      %189 = arith.addi %188, %c1_i32_112 : i32
      %c1_i32_113 = arith.constant 1 : i32
      %c0_i32_114 = arith.constant 0 : i32
      %190 = tpu.memref_slice %arg2[%157, %c0_i32_114] : memref<64x128xf32, #tpu.memory_space<any>> -> memref<1x128xf32, #tpu.memory_space<any>>
      %c0_i32_115 = arith.constant 0 : i32
      %191 = tpu.memref_slice %arg7[%189, %c0_i32_115] : memref<24x128xf32, #tpu.memory_space<vmem>> -> memref<1x128xf32, #tpu.memory_space<vmem>>
      %192 = tpu.memref_slice %arg8[%c1_i32_113] : memref<3x!tpu.dma_semaphore, #tpu.memory_space<semaphore_mem>> -> memref<1x!tpu.dma_semaphore, #tpu.memory_space<semaphore_mem>>
      %193 = tpu.memref_squeeze %192 : memref<1x!tpu.dma_semaphore, #tpu.memory_space<semaphore_mem>> -> memref<!tpu.dma_semaphore, #tpu.memory_space<semaphore_mem>>
      tpu.enqueue_dma source(%190 : memref<1x128xf32, #tpu.memory_space<any>>) target(%191 : memref<1x128xf32, #tpu.memory_space<vmem>>) target_semaphore(%193 : memref<!tpu.dma_semaphore, #tpu.memory_space<semaphore_mem>>)
      %c8_i32_116 = arith.constant 8 : i32
      %194 = arith.addi %c8_i32_116, %149 : i32
      %c2_i32_117 = arith.constant 2 : i32
      %195 = arith.addi %194, %c2_i32_117 : i32
      %c1_i32_118 = arith.constant 1 : i32
      %c0_i32_119 = arith.constant 0 : i32
      %196 = tpu.memref_slice %arg2[%161, %c0_i32_119] : memref<64x128xf32, #tpu.memory_space<any>> -> memref<1x128xf32, #tpu.memory_space<any>>
      %c0_i32_120 = arith.constant 0 : i32
      %197 = tpu.memref_slice %arg7[%195, %c0_i32_120] : memref<24x128xf32, #tpu.memory_space<vmem>> -> memref<1x128xf32, #tpu.memory_space<vmem>>
      %198 = tpu.memref_slice %arg8[%c1_i32_118] : memref<3x!tpu.dma_semaphore, #tpu.memory_space<semaphore_mem>> -> memref<1x!tpu.dma_semaphore, #tpu.memory_space<semaphore_mem>>
      %199 = tpu.memref_squeeze %198 : memref<1x!tpu.dma_semaphore, #tpu.memory_space<semaphore_mem>> -> memref<!tpu.dma_semaphore, #tpu.memory_space<semaphore_mem>>
      tpu.enqueue_dma source(%196 : memref<1x128xf32, #tpu.memory_space<any>>) target(%197 : memref<1x128xf32, #tpu.memory_space<vmem>>) target_semaphore(%199 : memref<!tpu.dma_semaphore, #tpu.memory_space<semaphore_mem>>)
      %c8_i32_121 = arith.constant 8 : i32
      %200 = arith.addi %c8_i32_121, %149 : i32
      %c3_i32_122 = arith.constant 3 : i32
      %201 = arith.addi %200, %c3_i32_122 : i32
      %c1_i32_123 = arith.constant 1 : i32
      %c0_i32_124 = arith.constant 0 : i32
      %202 = tpu.memref_slice %arg2[%165, %c0_i32_124] : memref<64x128xf32, #tpu.memory_space<any>> -> memref<1x128xf32, #tpu.memory_space<any>>
      %c0_i32_125 = arith.constant 0 : i32
      %203 = tpu.memref_slice %arg7[%201, %c0_i32_125] : memref<24x128xf32, #tpu.memory_space<vmem>> -> memref<1x128xf32, #tpu.memory_space<vmem>>
      %204 = tpu.memref_slice %arg8[%c1_i32_123] : memref<3x!tpu.dma_semaphore, #tpu.memory_space<semaphore_mem>> -> memref<1x!tpu.dma_semaphore, #tpu.memory_space<semaphore_mem>>
      %205 = tpu.memref_squeeze %204 : memref<1x!tpu.dma_semaphore, #tpu.memory_space<semaphore_mem>> -> memref<!tpu.dma_semaphore, #tpu.memory_space<semaphore_mem>>
      tpu.enqueue_dma source(%202 : memref<1x128xf32, #tpu.memory_space<any>>) target(%203 : memref<1x128xf32, #tpu.memory_space<vmem>>) target_semaphore(%205 : memref<!tpu.dma_semaphore, #tpu.memory_space<semaphore_mem>>)
      %c8_i32_126 = arith.constant 8 : i32
      %206 = arith.addi %c8_i32_126, %149 : i32
      %c4_i32_127 = arith.constant 4 : i32
      %207 = arith.addi %206, %c4_i32_127 : i32
      %c1_i32_128 = arith.constant 1 : i32
      %c0_i32_129 = arith.constant 0 : i32
      %208 = tpu.memref_slice %arg2[%169, %c0_i32_129] : memref<64x128xf32, #tpu.memory_space<any>> -> memref<1x128xf32, #tpu.memory_space<any>>
      %c0_i32_130 = arith.constant 0 : i32
      %209 = tpu.memref_slice %arg7[%207, %c0_i32_130] : memref<24x128xf32, #tpu.memory_space<vmem>> -> memref<1x128xf32, #tpu.memory_space<vmem>>
      %210 = tpu.memref_slice %arg8[%c1_i32_128] : memref<3x!tpu.dma_semaphore, #tpu.memory_space<semaphore_mem>> -> memref<1x!tpu.dma_semaphore, #tpu.memory_space<semaphore_mem>>
      %211 = tpu.memref_squeeze %210 : memref<1x!tpu.dma_semaphore, #tpu.memory_space<semaphore_mem>> -> memref<!tpu.dma_semaphore, #tpu.memory_space<semaphore_mem>>
      tpu.enqueue_dma source(%208 : memref<1x128xf32, #tpu.memory_space<any>>) target(%209 : memref<1x128xf32, #tpu.memory_space<vmem>>) target_semaphore(%211 : memref<!tpu.dma_semaphore, #tpu.memory_space<semaphore_mem>>)
      %c8_i32_131 = arith.constant 8 : i32
      %212 = arith.addi %c8_i32_131, %149 : i32
      %c5_i32_132 = arith.constant 5 : i32
      %213 = arith.addi %212, %c5_i32_132 : i32
      %c1_i32_133 = arith.constant 1 : i32
      %c0_i32_134 = arith.constant 0 : i32
      %214 = tpu.memref_slice %arg2[%173, %c0_i32_134] : memref<64x128xf32, #tpu.memory_space<any>> -> memref<1x128xf32, #tpu.memory_space<any>>
      %c0_i32_135 = arith.constant 0 : i32
      %215 = tpu.memref_slice %arg7[%213, %c0_i32_135] : memref<24x128xf32, #tpu.memory_space<vmem>> -> memref<1x128xf32, #tpu.memory_space<vmem>>
      %216 = tpu.memref_slice %arg8[%c1_i32_133] : memref<3x!tpu.dma_semaphore, #tpu.memory_space<semaphore_mem>> -> memref<1x!tpu.dma_semaphore, #tpu.memory_space<semaphore_mem>>
      %217 = tpu.memref_squeeze %216 : memref<1x!tpu.dma_semaphore, #tpu.memory_space<semaphore_mem>> -> memref<!tpu.dma_semaphore, #tpu.memory_space<semaphore_mem>>
      tpu.enqueue_dma source(%214 : memref<1x128xf32, #tpu.memory_space<any>>) target(%215 : memref<1x128xf32, #tpu.memory_space<vmem>>) target_semaphore(%217 : memref<!tpu.dma_semaphore, #tpu.memory_space<semaphore_mem>>)
      %c8_i32_136 = arith.constant 8 : i32
      %218 = arith.addi %c8_i32_136, %149 : i32
      %c6_i32_137 = arith.constant 6 : i32
      %219 = arith.addi %218, %c6_i32_137 : i32
      %c1_i32_138 = arith.constant 1 : i32
      %c0_i32_139 = arith.constant 0 : i32
      %220 = tpu.memref_slice %arg2[%177, %c0_i32_139] : memref<64x128xf32, #tpu.memory_space<any>> -> memref<1x128xf32, #tpu.memory_space<any>>
      %c0_i32_140 = arith.constant 0 : i32
      %221 = tpu.memref_slice %arg7[%219, %c0_i32_140] : memref<24x128xf32, #tpu.memory_space<vmem>> -> memref<1x128xf32, #tpu.memory_space<vmem>>
      %222 = tpu.memref_slice %arg8[%c1_i32_138] : memref<3x!tpu.dma_semaphore, #tpu.memory_space<semaphore_mem>> -> memref<1x!tpu.dma_semaphore, #tpu.memory_space<semaphore_mem>>
      %223 = tpu.memref_squeeze %222 : memref<1x!tpu.dma_semaphore, #tpu.memory_space<semaphore_mem>> -> memref<!tpu.dma_semaphore, #tpu.memory_space<semaphore_mem>>
      tpu.enqueue_dma source(%220 : memref<1x128xf32, #tpu.memory_space<any>>) target(%221 : memref<1x128xf32, #tpu.memory_space<vmem>>) target_semaphore(%223 : memref<!tpu.dma_semaphore, #tpu.memory_space<semaphore_mem>>)
      %c8_i32_141 = arith.constant 8 : i32
      %224 = arith.addi %c8_i32_141, %149 : i32
      %c7_i32_142 = arith.constant 7 : i32
      %225 = arith.addi %224, %c7_i32_142 : i32
      %c1_i32_143 = arith.constant 1 : i32
      %c0_i32_144 = arith.constant 0 : i32
      %226 = tpu.memref_slice %arg2[%181, %c0_i32_144] : memref<64x128xf32, #tpu.memory_space<any>> -> memref<1x128xf32, #tpu.memory_space<any>>
      %c0_i32_145 = arith.constant 0 : i32
      %227 = tpu.memref_slice %arg7[%225, %c0_i32_145] : memref<24x128xf32, #tpu.memory_space<vmem>> -> memref<1x128xf32, #tpu.memory_space<vmem>>
      %228 = tpu.memref_slice %arg8[%c1_i32_143] : memref<3x!tpu.dma_semaphore, #tpu.memory_space<semaphore_mem>> -> memref<1x!tpu.dma_semaphore, #tpu.memory_space<semaphore_mem>>
      %229 = tpu.memref_squeeze %228 : memref<1x!tpu.dma_semaphore, #tpu.memory_space<semaphore_mem>> -> memref<!tpu.dma_semaphore, #tpu.memory_space<semaphore_mem>>
      tpu.enqueue_dma source(%226 : memref<1x128xf32, #tpu.memory_space<any>>) target(%227 : memref<1x128xf32, #tpu.memory_space<vmem>>) target_semaphore(%229 : memref<!tpu.dma_semaphore, #tpu.memory_space<semaphore_mem>>)
      %c1_i32_146 = arith.constant 1 : i32
    } else {
    }
    %c2_i32 = arith.constant 2 : i32
    %13 = arith.addi %arg0, %c2_i32 : i32
    %c2_i32_5 = arith.constant 2 : i32
    %14 = arith.cmpi slt, %13, %c2_i32_5 : i32
    %15 = arith.extui %14 : i1 to i32
    %c0_i32_6 = arith.constant 0 : i32
    %16 = arith.cmpi ne, %15, %c0_i32_6 : i32
    scf.if %16 {
      %c2_i32_29 = arith.constant 2 : i32
      %64 = arith.addi %arg0, %c2_i32_29 : i32
      %c2_i32_30 = arith.constant 2 : i32
      %65 = arith.addi %arg0, %c2_i32_30 : i32
      %c3_i32_31 = arith.constant 3 : i32
      %c0_i32_32 = arith.constant 0 : i32
      %66 = arith.cmpi eq, %c3_i32_31, %c0_i32_32 : i32
      %c1_i32_33 = arith.constant 1 : i32
      %67 = arith.select %66, %c1_i32_33, %c3_i32_31 : i32
      %68 = arith.remsi %65, %67 : i32
      %c0_i32_34 = arith.constant 0 : i32
      %69 = arith.cmpi ne, %68, %c0_i32_34 : i32
      %c0_i32_35 = arith.constant 0 : i32
      %70 = arith.cmpi slt, %68, %c0_i32_35 : i32
      %c0_i32_36 = arith.constant 0 : i32
      %71 = arith.cmpi slt, %67, %c0_i32_36 : i32
      %72 = arith.xori %70, %71 : i1
      %73 = arith.andi %72, %69 : i1
      %74 = arith.addi %68, %67 : i32
      %75 = arith.select %73, %74, %68 : i32
      %c8_i32_37 = arith.constant 8 : i32
      %76 = arith.muli %64, %c8_i32_37 : i32
      %c8_i32_38 = arith.constant 8 : i32
      %77 = arith.muli %75, %c8_i32_38 : i32
      %c0_i32_39 = arith.constant 0 : i32
      %c1_i32_40 = arith.constant 1 : i32
      %78 = arith.muli %c0_i32_39, %c1_i32_40 : i32
      %c0_i32_41 = arith.constant 0 : i32
      %79 = arith.addi %c0_i32_41, %78 : i32
      %c8_i32_42 = arith.constant 8 : i32
      %80 = arith.muli %79, %c8_i32_42 : i32
      %81 = arith.addi %76, %80 : i32
      %c0_i32_43 = arith.constant 0 : i32
      %82 = arith.addi %81, %c0_i32_43 : i32
      %83 = arith.index_cast %82 : i32 to index
      %84 = memref.load %arg1[%83] : memref<16xi32, #tpu.memory_space<smem>>
      %85 = arith.addi %76, %80 : i32
      %c1_i32_44 = arith.constant 1 : i32
      %86 = arith.addi %85, %c1_i32_44 : i32
      %87 = arith.index_cast %86 : i32 to index
      %88 = memref.load %arg1[%87] : memref<16xi32, #tpu.memory_space<smem>>
      %89 = arith.addi %76, %80 : i32
      %c2_i32_45 = arith.constant 2 : i32
      %90 = arith.addi %89, %c2_i32_45 : i32
      %91 = arith.index_cast %90 : i32 to index
      %92 = memref.load %arg1[%91] : memref<16xi32, #tpu.memory_space<smem>>
      %93 = arith.addi %76, %80 : i32
      %c3_i32_46 = arith.constant 3 : i32
      %94 = arith.addi %93, %c3_i32_46 : i32
      %95 = arith.index_cast %94 : i32 to index
      %96 = memref.load %arg1[%95] : memref<16xi32, #tpu.memory_space<smem>>
      %97 = arith.addi %76, %80 : i32
      %c4_i32 = arith.constant 4 : i32
      %98 = arith.addi %97, %c4_i32 : i32
      %99 = arith.index_cast %98 : i32 to index
      %100 = memref.load %arg1[%99] : memref<16xi32, #tpu.memory_space<smem>>
      %101 = arith.addi %76, %80 : i32
      %c5_i32 = arith.constant 5 : i32
      %102 = arith.addi %101, %c5_i32 : i32
      %103 = arith.index_cast %102 : i32 to index
      %104 = memref.load %arg1[%103] : memref<16xi32, #tpu.memory_space<smem>>
      %105 = arith.addi %76, %80 : i32
      %c6_i32 = arith.constant 6 : i32
      %106 = arith.addi %105, %c6_i32 : i32
      %107 = arith.index_cast %106 : i32 to index
      %108 = memref.load %arg1[%107] : memref<16xi32, #tpu.memory_space<smem>>
      %109 = arith.addi %76, %80 : i32
      %c7_i32 = arith.constant 7 : i32
      %110 = arith.addi %109, %c7_i32 : i32
      %111 = arith.index_cast %110 : i32 to index
      %112 = memref.load %arg1[%111] : memref<16xi32, #tpu.memory_space<smem>>
      %113 = arith.addi %77, %80 : i32
      %c0_i32_47 = arith.constant 0 : i32
      %114 = arith.addi %113, %c0_i32_47 : i32
      %c0_i32_48 = arith.constant 0 : i32
      %115 = tpu.memref_slice %arg2[%84, %c0_i32_48] : memref<64x128xf32, #tpu.memory_space<any>> -> memref<1x128xf32, #tpu.memory_space<any>>
      %c0_i32_49 = arith.constant 0 : i32
      %116 = tpu.memref_slice %arg7[%114, %c0_i32_49] : memref<24x128xf32, #tpu.memory_space<vmem>> -> memref<1x128xf32, #tpu.memory_space<vmem>>
      %117 = tpu.memref_slice %arg8[%75] : memref<3x!tpu.dma_semaphore, #tpu.memory_space<semaphore_mem>> -> memref<1x!tpu.dma_semaphore, #tpu.memory_space<semaphore_mem>>
      %118 = tpu.memref_squeeze %117 : memref<1x!tpu.dma_semaphore, #tpu.memory_space<semaphore_mem>> -> memref<!tpu.dma_semaphore, #tpu.memory_space<semaphore_mem>>
      tpu.enqueue_dma source(%115 : memref<1x128xf32, #tpu.memory_space<any>>) target(%116 : memref<1x128xf32, #tpu.memory_space<vmem>>) target_semaphore(%118 : memref<!tpu.dma_semaphore, #tpu.memory_space<semaphore_mem>>)
      %119 = arith.addi %77, %80 : i32
      %c1_i32_50 = arith.constant 1 : i32
      %120 = arith.addi %119, %c1_i32_50 : i32
      %c0_i32_51 = arith.constant 0 : i32
      %121 = tpu.memref_slice %arg2[%88, %c0_i32_51] : memref<64x128xf32, #tpu.memory_space<any>> -> memref<1x128xf32, #tpu.memory_space<any>>
      %c0_i32_52 = arith.constant 0 : i32
      %122 = tpu.memref_slice %arg7[%120, %c0_i32_52] : memref<24x128xf32, #tpu.memory_space<vmem>> -> memref<1x128xf32, #tpu.memory_space<vmem>>
      %123 = tpu.memref_slice %arg8[%75] : memref<3x!tpu.dma_semaphore, #tpu.memory_space<semaphore_mem>> -> memref<1x!tpu.dma_semaphore, #tpu.memory_space<semaphore_mem>>
      %124 = tpu.memref_squeeze %123 : memref<1x!tpu.dma_semaphore, #tpu.memory_space<semaphore_mem>> -> memref<!tpu.dma_semaphore, #tpu.memory_space<semaphore_mem>>
      tpu.enqueue_dma source(%121 : memref<1x128xf32, #tpu.memory_space<any>>) target(%122 : memref<1x128xf32, #tpu.memory_space<vmem>>) target_semaphore(%124 : memref<!tpu.dma_semaphore, #tpu.memory_space<semaphore_mem>>)
      %125 = arith.addi %77, %80 : i32
      %c2_i32_53 = arith.constant 2 : i32
      %126 = arith.addi %125, %c2_i32_53 : i32
      %c0_i32_54 = arith.constant 0 : i32
      %127 = tpu.memref_slice %arg2[%92, %c0_i32_54] : memref<64x128xf32, #tpu.memory_space<any>> -> memref<1x128xf32, #tpu.memory_space<any>>
      %c0_i32_55 = arith.constant 0 : i32
      %128 = tpu.memref_slice %arg7[%126, %c0_i32_55] : memref<24x128xf32, #tpu.memory_space<vmem>> -> memref<1x128xf32, #tpu.memory_space<vmem>>
      %129 = tpu.memref_slice %arg8[%75] : memref<3x!tpu.dma_semaphore, #tpu.memory_space<semaphore_mem>> -> memref<1x!tpu.dma_semaphore, #tpu.memory_space<semaphore_mem>>
      %130 = tpu.memref_squeeze %129 : memref<1x!tpu.dma_semaphore, #tpu.memory_space<semaphore_mem>> -> memref<!tpu.dma_semaphore, #tpu.memory_space<semaphore_mem>>
      tpu.enqueue_dma source(%127 : memref<1x128xf32, #tpu.memory_space<any>>) target(%128 : memref<1x128xf32, #tpu.memory_space<vmem>>) target_semaphore(%130 : memref<!tpu.dma_semaphore, #tpu.memory_space<semaphore_mem>>)
      %131 = arith.addi %77, %80 : i32
      %c3_i32_56 = arith.constant 3 : i32
      %132 = arith.addi %131, %c3_i32_56 : i32
      %c0_i32_57 = arith.constant 0 : i32
      %133 = tpu.memref_slice %arg2[%96, %c0_i32_57] : memref<64x128xf32, #tpu.memory_space<any>> -> memref<1x128xf32, #tpu.memory_space<any>>
      %c0_i32_58 = arith.constant 0 : i32
      %134 = tpu.memref_slice %arg7[%132, %c0_i32_58] : memref<24x128xf32, #tpu.memory_space<vmem>> -> memref<1x128xf32, #tpu.memory_space<vmem>>
      %135 = tpu.memref_slice %arg8[%75] : memref<3x!tpu.dma_semaphore, #tpu.memory_space<semaphore_mem>> -> memref<1x!tpu.dma_semaphore, #tpu.memory_space<semaphore_mem>>
      %136 = tpu.memref_squeeze %135 : memref<1x!tpu.dma_semaphore, #tpu.memory_space<semaphore_mem>> -> memref<!tpu.dma_semaphore, #tpu.memory_space<semaphore_mem>>
      tpu.enqueue_dma source(%133 : memref<1x128xf32, #tpu.memory_space<any>>) target(%134 : memref<1x128xf32, #tpu.memory_space<vmem>>) target_semaphore(%136 : memref<!tpu.dma_semaphore, #tpu.memory_space<semaphore_mem>>)
      %137 = arith.addi %77, %80 : i32
      %c4_i32_59 = arith.constant 4 : i32
      %138 = arith.addi %137, %c4_i32_59 : i32
      %c0_i32_60 = arith.constant 0 : i32
      %139 = tpu.memref_slice %arg2[%100, %c0_i32_60] : memref<64x128xf32, #tpu.memory_space<any>> -> memref<1x128xf32, #tpu.memory_space<any>>
      %c0_i32_61 = arith.constant 0 : i32
      %140 = tpu.memref_slice %arg7[%138, %c0_i32_61] : memref<24x128xf32, #tpu.memory_space<vmem>> -> memref<1x128xf32, #tpu.memory_space<vmem>>
      %141 = tpu.memref_slice %arg8[%75] : memref<3x!tpu.dma_semaphore, #tpu.memory_space<semaphore_mem>> -> memref<1x!tpu.dma_semaphore, #tpu.memory_space<semaphore_mem>>
      %142 = tpu.memref_squeeze %141 : memref<1x!tpu.dma_semaphore, #tpu.memory_space<semaphore_mem>> -> memref<!tpu.dma_semaphore, #tpu.memory_space<semaphore_mem>>
      tpu.enqueue_dma source(%139 : memref<1x128xf32, #tpu.memory_space<any>>) target(%140 : memref<1x128xf32, #tpu.memory_space<vmem>>) target_semaphore(%142 : memref<!tpu.dma_semaphore, #tpu.memory_space<semaphore_mem>>)
      %143 = arith.addi %77, %80 : i32
      %c5_i32_62 = arith.constant 5 : i32
      %144 = arith.addi %143, %c5_i32_62 : i32
      %c0_i32_63 = arith.constant 0 : i32
      %145 = tpu.memref_slice %arg2[%104, %c0_i32_63] : memref<64x128xf32, #tpu.memory_space<any>> -> memref<1x128xf32, #tpu.memory_space<any>>
      %c0_i32_64 = arith.constant 0 : i32
      %146 = tpu.memref_slice %arg7[%144, %c0_i32_64] : memref<24x128xf32, #tpu.memory_space<vmem>> -> memref<1x128xf32, #tpu.memory_space<vmem>>
      %147 = tpu.memref_slice %arg8[%75] : memref<3x!tpu.dma_semaphore, #tpu.memory_space<semaphore_mem>> -> memref<1x!tpu.dma_semaphore, #tpu.memory_space<semaphore_mem>>
      %148 = tpu.memref_squeeze %147 : memref<1x!tpu.dma_semaphore, #tpu.memory_space<semaphore_mem>> -> memref<!tpu.dma_semaphore, #tpu.memory_space<semaphore_mem>>
      tpu.enqueue_dma source(%145 : memref<1x128xf32, #tpu.memory_space<any>>) target(%146 : memref<1x128xf32, #tpu.memory_space<vmem>>) target_semaphore(%148 : memref<!tpu.dma_semaphore, #tpu.memory_space<semaphore_mem>>)
      %149 = arith.addi %77, %80 : i32
      %c6_i32_65 = arith.constant 6 : i32
      %150 = arith.addi %149, %c6_i32_65 : i32
      %c0_i32_66 = arith.constant 0 : i32
      %151 = tpu.memref_slice %arg2[%108, %c0_i32_66] : memref<64x128xf32, #tpu.memory_space<any>> -> memref<1x128xf32, #tpu.memory_space<any>>
      %c0_i32_67 = arith.constant 0 : i32
      %152 = tpu.memref_slice %arg7[%150, %c0_i32_67] : memref<24x128xf32, #tpu.memory_space<vmem>> -> memref<1x128xf32, #tpu.memory_space<vmem>>
      %153 = tpu.memref_slice %arg8[%75] : memref<3x!tpu.dma_semaphore, #tpu.memory_space<semaphore_mem>> -> memref<1x!tpu.dma_semaphore, #tpu.memory_space<semaphore_mem>>
      %154 = tpu.memref_squeeze %153 : memref<1x!tpu.dma_semaphore, #tpu.memory_space<semaphore_mem>> -> memref<!tpu.dma_semaphore, #tpu.memory_space<semaphore_mem>>
      tpu.enqueue_dma source(%151 : memref<1x128xf32, #tpu.memory_space<any>>) target(%152 : memref<1x128xf32, #tpu.memory_space<vmem>>) target_semaphore(%154 : memref<!tpu.dma_semaphore, #tpu.memory_space<semaphore_mem>>)
      %155 = arith.addi %77, %80 : i32
      %c7_i32_68 = arith.constant 7 : i32
      %156 = arith.addi %155, %c7_i32_68 : i32
      %c0_i32_69 = arith.constant 0 : i32
      %157 = tpu.memref_slice %arg2[%112, %c0_i32_69] : memref<64x128xf32, #tpu.memory_space<any>> -> memref<1x128xf32, #tpu.memory_space<any>>
      %c0_i32_70 = arith.constant 0 : i32
      %158 = tpu.memref_slice %arg7[%156, %c0_i32_70] : memref<24x128xf32, #tpu.memory_space<vmem>> -> memref<1x128xf32, #tpu.memory_space<vmem>>
      %159 = tpu.memref_slice %arg8[%75] : memref<3x!tpu.dma_semaphore, #tpu.memory_space<semaphore_mem>> -> memref<1x!tpu.dma_semaphore, #tpu.memory_space<semaphore_mem>>
      %160 = tpu.memref_squeeze %159 : memref<1x!tpu.dma_semaphore, #tpu.memory_space<semaphore_mem>> -> memref<!tpu.dma_semaphore, #tpu.memory_space<semaphore_mem>>
      tpu.enqueue_dma source(%157 : memref<1x128xf32, #tpu.memory_space<any>>) target(%158 : memref<1x128xf32, #tpu.memory_space<vmem>>) target_semaphore(%160 : memref<!tpu.dma_semaphore, #tpu.memory_space<semaphore_mem>>)
      %c1_i32_71 = arith.constant 1 : i32
    } else {
    }
    %c8_i32 = arith.constant 8 : i32
    %17 = arith.muli %9, %c8_i32 : i32
    %c0_i32_7 = arith.constant 0 : i32
    %c0_i32_8 = arith.constant 0 : i32
    %18 = tpu.memref_slice %arg2[%c0_i32_7, %c0_i32_8] : memref<64x128xf32, #tpu.memory_space<any>> -> memref<8x128xf32, #tpu.memory_space<any>>
    %c0_i32_9 = arith.constant 0 : i32
    %19 = tpu.memref_slice %arg7[%17, %c0_i32_9] : memref<24x128xf32, #tpu.memory_space<vmem>> -> memref<8x128xf32, #tpu.memory_space<vmem>>
    %20 = tpu.memref_slice %arg8[%9] : memref<3x!tpu.dma_semaphore, #tpu.memory_space<semaphore_mem>> -> memref<1x!tpu.dma_semaphore, #tpu.memory_space<semaphore_mem>>
    %21 = tpu.memref_squeeze %20 : memref<1x!tpu.dma_semaphore, #tpu.memory_space<semaphore_mem>> -> memref<!tpu.dma_semaphore, #tpu.memory_space<semaphore_mem>>
    tpu.wait_dma2 semaphore(%21 : memref<!tpu.dma_semaphore, #tpu.memory_space<semaphore_mem>>) src(%18 : memref<8x128xf32, #tpu.memory_space<any>>) dst(%19 : memref<8x128xf32, #tpu.memory_space<vmem>>)
    %c8_i32_10 = arith.constant 8 : i32
    %22 = arith.muli %9, %c8_i32_10 : i32
    %23 = tpu.assume_multiple %22, 8 : i32
    %24 = arith.index_cast %23 : i32 to index
    %c0 = arith.constant 0 : index
    %25 = vector.load %arg7[%24, %c0] : memref<24x128xf32, #tpu.memory_space<vmem>>, vector<8x128xf32>
    %c1_i32_11 = arith.constant 1 : i32
    %c0_i32_12 = arith.constant 0 : i32
    %26 = arith.cmpi eq, %c1_i32_11, %c0_i32_12 : i32
    %c1_i32_13 = arith.constant 1 : i32
    %27 = arith.select %26, %c1_i32_13, %c1_i32_11 : i32
    %28 = arith.remsi %arg0, %27 : i32
    %c0_i32_14 = arith.constant 0 : i32
    %29 = arith.cmpi ne, %28, %c0_i32_14 : i32
    %c0_i32_15 = arith.constant 0 : i32
    %30 = arith.cmpi slt, %28, %c0_i32_15 : i32
    %c0_i32_16 = arith.constant 0 : i32
    %31 = arith.cmpi slt, %27, %c0_i32_16 : i32
    %32 = arith.xori %30, %31 : i1
    %33 = arith.andi %32, %29 : i1
    %34 = arith.addi %28, %27 : i32
    %35 = arith.select %33, %34, %28 : i32
    %c8_i32_17 = arith.constant 8 : i32
    %36 = arith.muli %35, %c8_i32_17 : i32
    %37 = tpu.assume_multiple %36, 8 : i32
    %38 = arith.index_cast %37 : i32 to index
    %c0_18 = arith.constant 0 : index
    %39 = vector.load %arg3[%38, %c0_18] : memref<16x128xf32, #tpu.memory_space<vmem>>, vector<8x128xf32>
    %40 = arith.addf %25, %39 : vector<8x128xf32>
    %cst = arith.constant dense<0.000000e+00> : vector<8xf32>
    %41 = vector.multi_reduction <add>, %40, %cst [1] : vector<8x128xf32> to vector<8xf32>
    %42 = vector.shape_cast %41 : vector<8xf32> to vector<8x1xf32>
    %cst_19 = arith.constant 7.812500e-03 : f32
    %43 = vector.broadcast %cst_19 : f32 to vector<8x1xf32>
    %44 = arith.mulf %42, %43 : vector<8x1xf32>
    %45 = vector.broadcast %44 : vector<8x1xf32> to vector<8x128xf32>
    %46 = arith.subf %40, %45 : vector<8x128xf32>
    %47 = arith.mulf %46, %46 : vector<8x128xf32>
    %cst_20 = arith.constant dense<0.000000e+00> : vector<8xf32>
    %48 = vector.multi_reduction <add>, %47, %cst_20 [1] : vector<8x128xf32> to vector<8xf32>
    %49 = vector.shape_cast %48 : vector<8xf32> to vector<8x1xf32>
    %cst_21 = arith.constant 7.812500e-03 : f32
    %50 = vector.broadcast %cst_21 : f32 to vector<8x1xf32>
    %51 = arith.mulf %49, %50 : vector<8x1xf32>
    %cst_22 = arith.constant 9.99999996E-13 : f32
    %52 = vector.broadcast %cst_22 : f32 to vector<8x1xf32>
    %53 = arith.addf %51, %52 : vector<8x1xf32>
    %54 = math.rsqrt %53 : vector<8x1xf32>
    %55 = vector.broadcast %54 : vector<8x1xf32> to vector<8x128xf32>
    %56 = arith.mulf %46, %55 : vector<8x128xf32>
    %c0_23 = arith.constant 0 : index
    %c0_24 = arith.constant 0 : index
    %57 = vector.load %arg4[%c0_23, %c0_24] : memref<1x128xf32, #tpu.memory_space<vmem>>, vector<1x128xf32>
    %58 = vector.broadcast %57 : vector<1x128xf32> to vector<8x128xf32>
    %59 = arith.mulf %56, %58 : vector<8x128xf32>
    %c0_25 = arith.constant 0 : index
    %c0_26 = arith.constant 0 : index
    %60 = vector.load %arg5[%c0_25, %c0_26] : memref<1x128xf32, #tpu.memory_space<vmem>>, vector<1x128xf32>
    %61 = vector.broadcast %60 : vector<1x128xf32> to vector<8x128xf32>
    %62 = arith.addf %59, %61 : vector<8x128xf32>
    %c0_27 = arith.constant 0 : index
    %c0_28 = arith.constant 0 : index
    %63 = vector.load %arg6[%c0_27, %c0_28] : memref<8x128xf32, #tpu.memory_space<vmem>>, vector<8x128xf32>
    tpu.vector_store %arg6[%c0_27, %c0_28], %62 {strides = array<i32>} : memref<8x128xf32, #tpu.memory_space<vmem>>, vector<8x128xf32>,
    return
  }
  func.func @transform_1(%arg0: i32, %arg1: memref<16xi32, #tpu.memory_space<smem>>) -> (i32, i32) {
    %c0_i32 = arith.constant 0 : i32
    %c0_i32_0 = arith.constant 0 : i32
    %c0_i32_1 = arith.constant 0 : i32
    return %c0_i32, %c0_i32_0 : i32, i32
  }
  func.func @transform_2(%arg0: i32, %arg1: memref<16xi32, #tpu.memory_space<smem>>) -> (i32, i32) {
    %c0_i32 = arith.constant 0 : i32
    %c0_i32_0 = arith.constant 0 : i32
    %c0_i32_1 = arith.constant 0 : i32
    return %c0_i32, %c0_i32_0 : i32, i32
  }
  func.func @transform_3(%arg0: i32, %arg1: memref<16xi32, #tpu.memory_space<smem>>) -> (i32, i32) {
    %c0_i32 = arith.constant 0 : i32
    %c0_i32_0 = arith.constant 0 : i32
    %c0_i32_1 = arith.constant 0 : i32
    return %c0_i32, %c0_i32_0 : i32, i32
  }
  func.func @transform_4(%arg0: i32, %arg1: memref<16xi32, #tpu.memory_space<smem>>) -> (i32, i32) {
    %c0_i32 = arith.constant 0 : i32
    %c0_i32_0 = arith.constant 0 : i32
    return %arg0, %c0_i32 : i32, i32
  }
}

</mosaic_0001>

<llo_original>
// kernel: tpu_custom_call.1
$region0: #{tpu_custom_call.1}
  #allocation0 [shape = 'u32[]', space=smem, size = 0x4, offset = 0x4, fixed_abs, tag = 'smem constant byte address 0x4 - core index']
  #allocation1 [shape = 'u32[144,128]{1,0:T(1,128)}', space=vmem, size = 0x12000, scoped, tag = 'internal scratch']
  #allocation2 [shape = 'f32[24,128]{1,0:T(8,128)}', space=vmem, size = 0x3000, scoped, tag = 'scratch operand']
  #allocation3 [shape = 's32[3]{0}', space=sflag, size = 0xc, scoped, tag = 'scratch operand']
  #allocation4 [shape = 's32[1]{0}', space=sflag, size = 0x4, scoped, tag = 'scoped memory for tpu_custom_call.1']
  #allocation5 [shape = 'u8[512]{0}', space=smem, size = 0x200, scoped, tag = 'prefetched SMEM operand 0']
  #allocation10 [shape = 's32[]', space=sflag, size = 0x4, offset = 0, fixed_abs, tag = 'sflag constant byte address 0x0 - dummy sync flag']
  #allocation11 [shape = 's32[]', space=sflag, size = 0x4, offset = 0, fixed_abs, tag = 'sflag constant byte address 0x0 - dummy sync flag']
  #allocation12 [shape = 'u32[]', space=smem, size = 0x4, offset = 0x44, fixed_abs, tag = 'smem constant byte address 0x44 - assertion arg 0']
  #allocation13 [shape = 'u32[]', space=smem, size = 0x4, offset = 0x48, fixed_abs, tag = 'smem constant byte address 0x48 - assertion arg 1']
  #allocation14 [shape = 's32[]', space=sflag, size = 0x4, offset = 0, fixed_abs, tag = 'sflag constant byte address 0x0 - dummy sync flag']
  #allocation15 [shape = 's32[]', space=sflag, size = 0x4, offset = 0, fixed_abs, tag = 'sflag constant byte address 0x0 - dummy sync flag']
  #allocation16 [shape = 's32[]', space=sflag, size = 0x4, offset = 0, fixed_abs, tag = 'sflag constant byte address 0x0 - dummy sync flag']
  #allocation17 [shape = 's32[]', space=sflag, size = 0x4, offset = 0, fixed_abs, tag = 'sflag constant byte address 0x0 - dummy sync flag']
  #allocation18 [shape = 's32[]', space=sflag, size = 0x4, offset = 0, fixed_abs, tag = 'sflag constant byte address 0x0 - dummy sync flag']
  #allocation19 [shape = 's32[]', space=sflag, size = 0x4, offset = 0, fixed_abs, tag = 'sflag constant byte address 0x0 - dummy sync flag']
  #allocation20 [shape = 's32[]', space=sflag, size = 0x4, offset = 0, fixed_abs, tag = 'sflag constant byte address 0x0 - dummy sync flag']
  #allocation21 [shape = 's32[]', space=sflag, size = 0x4, offset = 0, fixed_abs, tag = 'sflag constant byte address 0x0 - dummy sync flag']
  #allocation22 [shape = 's32[]', space=sflag, size = 0x4, offset = 0, fixed_abs, tag = 'sflag constant byte address 0x0 - dummy sync flag']
  #allocation23 [shape = 's32[]', space=sflag, size = 0x4, offset = 0, fixed_abs, tag = 'sflag constant byte address 0x0 - dummy sync flag']
  #allocation24 [shape = 's32[]', space=sflag, size = 0x4, offset = 0, fixed_abs, tag = 'sflag constant byte address 0x0 - dummy sync flag']
  #allocation25 [shape = 's32[]', space=sflag, size = 0x4, offset = 0, fixed_abs, tag = 'sflag constant byte address 0x0 - dummy sync flag']
  #allocation26 [shape = 's32[]', space=sflag, size = 0x4, offset = 0, fixed_abs, tag = 'sflag constant byte address 0x0 - dummy sync flag']
  #allocation27 [shape = 's32[]', space=sflag, size = 0x4, offset = 0, fixed_abs, tag = 'sflag constant byte address 0x0 - dummy sync flag']
  #allocation28 [shape = 's32[]', space=sflag, size = 0x4, offset = 0, fixed_abs, tag = 'sflag constant byte address 0x0 - dummy sync flag']
  #allocation29 [shape = 's32[]', space=sflag, size = 0x4, offset = 0, fixed_abs, tag = 'sflag constant byte address 0x0 - dummy sync flag']
  #allocation30 [shape = 's32[]', space=sflag, size = 0x4, offset = 0, fixed_abs, tag = 'sflag constant byte address 0x0 - dummy sync flag']
  #allocation31 [shape = 's32[]', space=sflag, size = 0x4, offset = 0, fixed_abs, tag = 'sflag constant byte address 0x0 - dummy sync flag']
  #allocation32 [shape = 's32[]', space=sflag, size = 0x4, offset = 0, fixed_abs, tag = 'sflag constant byte address 0x0 - dummy sync flag']
  #allocation33 [shape = 's32[]', space=sflag, size = 0x4, offset = 0, fixed_abs, tag = 'sflag constant byte address 0x0 - dummy sync flag']
  #allocation34 [shape = 's32[]', space=sflag, size = 0x4, offset = 0, fixed_abs, tag = 'sflag constant byte address 0x0 - dummy sync flag']
  #allocation35 [shape = 's32[]', space=sflag, size = 0x4, offset = 0, fixed_abs, tag = 'sflag constant byte address 0x0 - dummy sync flag']
  #allocation36 [shape = 's32[]', space=sflag, size = 0x4, offset = 0, fixed_abs, tag = 'sflag constant byte address 0x0 - dummy sync flag']
  #allocation37 [shape = 's32[]', space=sflag, size = 0x4, offset = 0, fixed_abs, tag = 'sflag constant byte address 0x0 - dummy sync flag']
  #allocation38 [shape = 's32[]', space=sflag, size = 0x4, offset = 0, fixed_abs, tag = 'sflag constant byte address 0x0 - dummy sync flag']
  #allocation39 [shape = 's32[]', space=sflag, size = 0x4, offset = 0, fixed_abs, tag = 'sflag constant byte address 0x0 - dummy sync flag']
  #allocation40 [shape = 's32[]', space=sflag, size = 0x4, offset = 0, fixed_abs, tag = 'sflag constant byte address 0x0 - dummy sync flag']
  #allocation41 [shape = 's32[]', space=sflag, size = 0x4, offset = 0, fixed_abs, tag = 'sflag constant byte address 0x0 - dummy sync flag']
  #allocation42 [shape = 's32[]', space=sflag, size = 0x4, offset = 0, fixed_abs, tag = 'sflag constant byte address 0x0 - dummy sync flag']
  #allocation43 [shape = 's32[]', space=sflag, size = 0x4, offset = 0, fixed_abs, tag = 'sflag constant byte address 0x0 - dummy sync flag']
  #allocation44 [shape = 's32[]', space=sflag, size = 0x4, offset = 0, fixed_abs, tag = 'sflag constant byte address 0x0 - dummy sync flag']
  #allocation45 [shape = 's32[]', space=sflag, size = 0x4, offset = 0, fixed_abs, tag = 'sflag constant byte address 0x0 - dummy sync flag']
  #allocation46 [shape = 's32[]', space=sflag, size = 0x4, offset = 0, fixed_abs, tag = 'sflag constant byte address 0x0 - dummy sync flag']
  #allocation47 [shape = 's32[]', space=sflag, size = 0x4, offset = 0, fixed_abs, tag = 'sflag constant byte address 0x0 - dummy sync flag']
  #allocation48 [shape = 's32[]', space=sflag, size = 0x4, offset = 0, fixed_abs, tag = 'sflag constant byte address 0x0 - dummy sync flag']
  #allocation49 [shape = 's32[]', space=sflag, size = 0x4, offset = 0, fixed_abs, tag = 'sflag constant byte address 0x0 - dummy sync flag']
  #allocation50 [shape = 's32[]', space=sflag, size = 0x4, offset = 0, fixed_abs, tag = 'sflag constant byte address 0x0 - dummy sync flag']
  #allocation51 [shape = 's32[]', space=sflag, size = 0x4, offset = 0, fixed_abs, tag = 'sflag constant byte address 0x0 - dummy sync flag']
  #allocation52 [shape = 's32[]', space=sflag, size = 0x4, offset = 0, fixed_abs, tag = 'sflag constant byte address 0x0 - dummy sync flag']
  #allocation53 [shape = 's32[]', space=sflag, size = 0x4, offset = 0, fixed_abs, tag = 'sflag constant byte address 0x0 - dummy sync flag']
  #allocation54 [shape = 's32[]', space=sflag, size = 0x4, offset = 0, fixed_abs, tag = 'sflag constant byte address 0x0 - dummy sync flag']
  #allocation55 [shape = 's32[]', space=sflag, size = 0x4, offset = 0, fixed_abs, tag = 'sflag constant byte address 0x0 - dummy sync flag']
  #allocation56 [shape = 's32[]', space=sflag, size = 0x4, offset = 0, fixed_abs, tag = 'sflag constant byte address 0x0 - dummy sync flag']
  #allocation57 [shape = 's32[]', space=sflag, size = 0x4, offset = 0, fixed_abs, tag = 'sflag constant byte address 0x0 - dummy sync flag']
  #allocation58 [shape = 's32[]', space=sflag, size = 0x4, offset = 0, fixed_abs, tag = 'sflag constant byte address 0x0 - dummy sync flag']
  #allocation59 [shape = 's32[]', space=sflag, size = 0x4, offset = 0, fixed_abs, tag = 'sflag constant byte address 0x0 - dummy sync flag']
  %s0 = inlined_call_operand.hbm [shape: s32[16], index: 0, kind: input, shape index: {}]
  %s1 = inlined_call_operand.hbm [shape: f32[64,128], index: 1, kind: input, shape index: {}]
  %s2 = inlined_call_operand.hbm [shape: f32[16,128], index: 2, kind: input, shape index: {}]
  %s3 = inlined_call_operand.vmem [shape: f32[1,128], index: 3, kind: input, shape index: {}]
  %s4 = inlined_call_operand.vmem [shape: f32[1,128], index: 4, kind: input, shape index: {}]
  %s5 = inlined_call_operand.hbm [shape: f32[16,128], index: 5, kind: output, shape index: {}]
  %s6 = sld [smem:[#allocation0]]
  $region153: #{tpu_custom_call.1} parent=0
    _
  %s8 = ssub.s32 1, %s6
  %s9 = scalar_select 0, %s8, %s6
  %11 = dma.hbm_to_smem %s0, 16, [#allocation5], [#allocation4]
  %12 = dma.done [#allocation4], 16
  %13 = sfence
  $region1: #{tpu_custom_call.1} parent=0
    #allocation6 [shape = 'u8[8192]{0}', space=vmem, size = 0x2000, scoped, tag = 'input window, operand 2, single buffered']
    #allocation7 [shape = 's32[2]{0}', space=sflag, size = 0x8, scoped, tag = 'scoped memory for tpu_custom_call.1']
    #allocation8 [shape = 's32[2]{0}', space=sflag, size = 0x8, scoped, tag = 'scoped memory for tpu_custom_call.1']
    #allocation9 [shape = 'u8[8192]{0}', space=vmem, size = 0x2000, scoped, tag = 'output window, operand 0']
    %14 = vsyncpa [#allocation7], 0
    %15 = vsyncpa [#allocation8], 0
    %s16 = scalar_lea.sflag [#allocation8], 1
    %17 = vsyncpa %s16, 0
    loop: start=0, step=1, limit=4
    $region2: #{tpu_custom_call.1} parent=1 // loop_pre_header
      _
    $region3: #{tpu_custom_call.1} parent=1 // loop_header
      %s19 = sphi 0, %s23
      %p20 = scmp.ge.s32.totalorder %s19, 4
      %s27 = sphi 0, %s27
      %s29 = sphi 0, %s27
      %s30 = sphi 0, %s29
      %s44 = sphi 0, %s30
      %s48 = sphi 0, %s48
      %s50 = sphi 0, %s48
      %s51 = sphi 0, %s50
      %s65 = sphi 0, %s51
      %s69 = sphi 0, %s69
      %s71 = sphi 0, %s69
      %s72 = sphi 0, %s71
      %s86 = sphi 0, %s72
      %s92 = sphi 0, %s94
      %s95 = sphi 0, %s92
      %s96 = sphi 0, %s95
      %s112 = sphi 0, %s96
    $region4: #{tpu_custom_call.1} parent=1 // loop_header_branch
      %22 = sbr.rel (%p20) target = $region8
    $region5: #{tpu_custom_call.1} parent=1 // loop_body
      %s24 = ssub.s32 %s19, 1
      %s25 = ssub.s32 %s19, 2
      %s26 = sadd.s32 %s19, 1
      %s28 = sadd.s32 %s27, 1
      %p31 = scmp.eq.s32.totalorder %s19, 1
      %p32 = scmp.ne.s32.totalorder %s27, %s29
      %p33 = scmp.eq.s32.totalorder %s19, 0
      %p34 = por %p32, %p33
      %p35 = scmp.ne.s32.totalorder %s27, %s29
      %p36 = scmp.eq.s32.totalorder %s24, 1
      %p37 = por %p35, %p36
      %p38 = scmp.ne.s32.totalorder %s29, %s30
      %p39 = scmp.eq.s32.totalorder %s24, 0
      %p40 = por %p38, %p39
      %p41 = scmp.ne.s32.totalorder %s29, %s30
      %p42 = scmp.eq.s32.totalorder %s25, 1
      %p43 = por %p41, %p42
      %p45 = scmp.ne.s32.totalorder %s30, %s44
      %p46 = scmp.eq.s32.totalorder %s25, 0
      %p47 = por %p45, %p46
      %s49 = sadd.s32 %s48, 1
      %p52 = scmp.eq.s32.totalorder %s19, 1
      %p53 = scmp.ne.s32.totalorder %s48, %s50
      %p54 = scmp.eq.s32.totalorder %s19, 0
      %p55 = por %p53, %p54
      %p56 = scmp.ne.s32.totalorder %s48, %s50
      %p57 = scmp.eq.s32.totalorder %s24, 1
      %p58 = por %p56, %p57
      %p59 = scmp.ne.s32.totalorder %s50, %s51
      %p60 = scmp.eq.s32.totalorder %s24, 0
      %p61 = por %p59, %p60
      %p62 = scmp.ne.s32.totalorder %s50, %s51
      %p63 = scmp.eq.s32.totalorder %s25, 1
      %p64 = por %p62, %p63
      %p66 = scmp.ne.s32.totalorder %s51, %s65
      %p67 = scmp.eq.s32.totalorder %s25, 0
      %p68 = por %p66, %p67
      %s70 = sadd.s32 %s69, 1
      %p73 = scmp.eq.s32.totalorder %s19, 1
      %p74 = scmp.ne.s32.totalorder %s69, %s71
      %p75 = scmp.eq.s32.totalorder %s19, 0
      %p76 = por %p74, %p75
      %p77 = scmp.ne.s32.totalorder %s69, %s71
      %p78 = scmp.eq.s32.totalorder %s24, 1
      %p79 = por %p77, %p78
      %p80 = scmp.ne.s32.totalorder %s71, %s72
      %p81 = scmp.eq.s32.totalorder %s24, 0
      %p82 = por %p80, %p81
      %p83 = scmp.ne.s32.totalorder %s71, %s72
      %p84 = scmp.eq.s32.totalorder %s25, 1
      %p85 = por %p83, %p84
      %p87 = scmp.ne.s32.totalorder %s72, %s86
      %p88 = scmp.eq.s32.totalorder %s25, 0
      %p89 = por %p87, %p88
      %s90 = ssub.s32 %s19, %s26
      %p91 = scmp.eq.s32.totalorder %s90, 0
      %s93 = sadd.s32 %s92, 1
      %s94 = scalar_select %p91, %s92, %s93
      %p97 = pneg %p91
      %p98 = scmp.eq.s32.totalorder %s19, 1
      %p99 = por %p97, %p98
      %p100 = scmp.ne.s32.totalorder %s92, %s95
      %p101 = scmp.eq.s32.totalorder %s19, 0
      %p102 = por %p100, %p101
      %p103 = scmp.ne.s32.totalorder %s92, %s95
      %p104 = scmp.eq.s32.totalorder %s24, 1
      %p105 = por %p103, %p104
      %p106 = scmp.ne.s32.totalorder %s95, %s96
      %p107 = scmp.eq.s32.totalorder %s24, 0
      %p108 = por %p106, %p107
      %p109 = scmp.ne.s32.totalorder %s95, %s96
      %p110 = scmp.eq.s32.totalorder %s25, 1
      %p111 = por %p109, %p110
      %p113 = scmp.ne.s32.totalorder %s96, %s112
      %p114 = scmp.eq.s32.totalorder %s25, 0
      %p115 = por %p113, %p114
      %p116 = scmp.le.s32.totalorder 1, %s19
      %p117 = scmp.lt.s32.totalorder %s19, 3
      %p118 = pnand %p116, %p117
      %p119 = pneg %p118
      // Predicated region
      $region9: #{tpu_custom_call.1} parent=5 // pred_check
        _
      $region10: #{tpu_custom_call.1} parent=5 // pred_check_branch
        %121 = sbr.rel (%p118) target = $region12
      $region11: #{tpu_custom_call.1} parent=5 // pred_region
        %s122 = ssub.s32 %s19, 1
        // Predicated region
        $region13: #{tpu_custom_call.1} parent=11 // pred_check
          %p123 = pneg %p40
        $region14: #{tpu_custom_call.1} parent=11 // pred_check_branch
          %125 = sbr.rel (%p123) target = $region16
        $region15: #{tpu_custom_call.1} parent=11 // pred_region
          %s127 = ssub.s32 256, 256
          %128 = vsyncadd [#allocation7], %s127
          %s129 = sshll.u32 [#allocation6], 4
          %s130 = int_to_ptr.vmem [resolvable:$true] %s129
          %135 = dma.hbm_to_vmem [thread:$0]  %s2, 256, %s130, [#allocation7], 128, 128, 8
        $region16: #{tpu_custom_call.1} parent=11 // pred_fallthru
          _
        // Predicated region
        $region17: #{tpu_custom_call.1} parent=11 // pred_check
          %p136 = pneg %p61
        $region18: #{tpu_custom_call.1} parent=11 // pred_check_branch
          %138 = sbr.rel (%p136) target = $region20
        $region19: #{tpu_custom_call.1} parent=11 // pred_region
          _
        $region20: #{tpu_custom_call.1} parent=11 // pred_fallthru
          _
        // Predicated region
        $region21: #{tpu_custom_call.1} parent=11 // pred_check
          %p139 = pneg %p82
        $region22: #{tpu_custom_call.1} parent=11 // pred_check_branch
          %141 = sbr.rel (%p139) target = $region24
        $region23: #{tpu_custom_call.1} parent=11 // pred_region
          _
        $region24: #{tpu_custom_call.1} parent=11 // pred_fallthru
          _
      $region12: #{tpu_custom_call.1} parent=5 // pred_fallthru
        _
      %p142 = scmp.lt.s32.totalorder %s19, 2
      // Predicated region
      $region25: #{tpu_custom_call.1} parent=5 // pred_check
        %p143 = pneg %p142
      $region26: #{tpu_custom_call.1} parent=5 // pred_check_branch
        %145 = sbr.rel (%p143) target = $region28
      $region27: #{tpu_custom_call.1} parent=5 // pred_region
        _
      $region28: #{tpu_custom_call.1} parent=5 // pred_fallthru
        _
      %p146 = scmp.le.s32.totalorder 1, %s19
      %p147 = scmp.lt.s32.totalorder %s19, 3
      %p148 = pnand %p146, %p147
      %p149 = pneg %p148
      // Predicated region
      $region29: #{tpu_custom_call.1} parent=5 // pred_check
        _
      $region30: #{tpu_custom_call.1} parent=5 // pred_check_branch
        %151 = sbr.rel (%p148) target = $region32
      $region31: #{tpu_custom_call.1} parent=5 // pred_region
        %s152 = ssub.s32 %s19, 1
        // Predicated region
        $region33: #{tpu_custom_call.1} parent=31 // pred_check
          %p153 = pneg %p40
        $region34: #{tpu_custom_call.1} parent=31 // pred_check_branch
          %155 = sbr.rel (%p153) target = $region36
        $region35: #{tpu_custom_call.1} parent=31 // pred_region
          %156 = dma.done [#allocation7], 256
        $region36: #{tpu_custom_call.1} parent=31 // pred_fallthru
          _
        %p157 = pneg %p40
        %p158 = pneg %p37
        %p159 = pneg %p61
        %p160 = pneg %p58
        %p161 = pneg %p82
        %p162 = pneg %p79
        %p163 = pneg %p108
        %p164 = pneg %p105
        %s165 = sand.u32 %s95, 1
        %s166 = scalar_lea.sflag [#allocation8], %s165
        %s167 = sand.u32 %s95, 1
        %s168 = smul.addr %s167, 8
        %s169 = scalar_lea.vmem [#allocation9], %s168
        %p170 = scmp.lt.s32.totalorder %s24, 0
        %s171 = ssub.s32 0, %s24
        %s172 = scalar_select %p170, %s171, %s24
        %s173 = sdiv.u32.pop %s172, 3
        %s174 = srem.u32.pop %s172, 3
        %s175 = ssub.s32 0, %s174
        %s176 = scalar_select %p170, %s175, %s174
        %p177 = scmp.ne.s32.totalorder %s176, 0
        %p178 = scmp.lt.s32.totalorder %s176, 0
        %p179 = pnand %p178, %p177
        %p180 = pneg %p179
        %s181 = sadd.s32 %s176, 3
        %s182 = scalar_select %p180, %s181, %s176
        %p183 = scmp.eq.s32.totalorder %s24, 0
        // Predicated region
        $region37: #{tpu_custom_call.1} parent=31 // pred_check
          %p184 = pneg %p183
        $region38: #{tpu_custom_call.1} parent=31 // pred_check_branch
          %186 = sbr.rel (%p184) target = $region40
        $region39: #{tpu_custom_call.1} parent=31 // pred_region
          %s187 = sld [smem:[#allocation5]]
          %s188 = sld [smem:[#allocation5 + $0x1]]
          %s189 = sld [smem:[#allocation5 + $0x2]]
          %s190 = sld [smem:[#allocation5 + $0x3]]
          %s191 = sld [smem:[#allocation5 + $0x4]]
          %s192 = sld [smem:[#allocation5 + $0x5]]
          %s193 = sld [smem:[#allocation5 + $0x6]]
          %s194 = sld [smem:[#allocation5 + $0x7]]
          %s195 = smul.addr %s187, 16
          %s196 = scalar_lea.hbm %s1, %s195
          // Predicated region
          $region41: #{tpu_custom_call.1} parent=39 // pred_check
            _
          $region42: #{tpu_custom_call.1} parent=39 // pred_check_branch
            %198 = sbr.rel target = $region44
          $region43: #{tpu_custom_call.1} parent=39 // pred_region
            %199 = sst [smem:[#allocation12]] [#allocation11]
            %200 = sst [smem:[#allocation13]] [#allocation10]
          $region44: #{tpu_custom_call.1} parent=39 // pred_fallthru
            _
          %202 = shalt.err (0)
          %s204 = sshll.u32 [#allocation2], 4
          %s205 = int_to_ptr.vmem [resolvable:$true] %s204
          %207 = dma.hbm_to_vmem [thread:$0]  %s196, 16, %s205, [#allocation3]
          %s208 = smul.addr %s188, 16
          %s209 = scalar_lea.hbm %s1, %s208
          %s210 = scalar_lea.vmem [#allocation2], 1
          // Predicated region
          $region45: #{tpu_custom_call.1} parent=39 // pred_check
            _
          $region46: #{tpu_custom_call.1} parent=39 // pred_check_branch
            %212 = sbr.rel target = $region48
          $region47: #{tpu_custom_call.1} parent=39 // pred_region
            %213 = sst [smem:[#allocation12]] [#allocation15]
            %214 = sst [smem:[#allocation13]] [#allocation14]
          $region48: #{tpu_custom_call.1} parent=39 // pred_fallthru
            _
          %216 = shalt.err (0)
          %s218 = sshll.u32 %s210, 4
          %s219 = int_to_ptr.vmem [resolvable:$true] %s218
          %221 = dma.hbm_to_vmem [thread:$0]  %s209, 16, %s219, [#allocation3]
          %s222 = smul.addr %s189, 16
          %s223 = scalar_lea.hbm %s1, %s222
          %s224 = scalar_lea.vmem [#allocation2], 2
          // Predicated region
          $region49: #{tpu_custom_call.1} parent=39 // pred_check
            _
          $region50: #{tpu_custom_call.1} parent=39 // pred_check_branch
            %226 = sbr.rel target = $region52
          $region51: #{tpu_custom_call.1} parent=39 // pred_region
            %227 = sst [smem:[#allocation12]] [#allocation17]
            %228 = sst [smem:[#allocation13]] [#allocation16]
          $region52: #{tpu_custom_call.1} parent=39 // pred_fallthru
            _
          %230 = shalt.err (0)
          %s232 = sshll.u32 %s224, 4
          %s233 = int_to_ptr.vmem [resolvable:$true] %s232
          %235 = dma.hbm_to_vmem [thread:$0]  %s223, 16, %s233, [#allocation3]
          %s236 = smul.addr %s190, 16
          %s237 = scalar_lea.hbm %s1, %s236
          %s238 = scalar_lea.vmem [#allocation2], 3
          // Predicated region
          $region53: #{tpu_custom_call.1} parent=39 // pred_check
            _
          $region54: #{tpu_custom_call.1} parent=39 // pred_check_branch
            %240 = sbr.rel target = $region56
          $region55: #{tpu_custom_call.1} parent=39 // pred_region
            %241 = sst [smem:[#allocation12]] [#allocation19]
            %242 = sst [smem:[#allocation13]] [#allocation18]
          $region56: #{tpu_custom_call.1} parent=39 // pred_fallthru
            _
          %244 = shalt.err (0)
          %s246 = sshll.u32 %s238, 4
          %s247 = int_to_ptr.vmem [resolvable:$true] %s246
          %249 = dma.hbm_to_vmem [thread:$0]  %s237, 16, %s247, [#allocation3]
          %s250 = smul.addr %s191, 16
          %s251 = scalar_lea.hbm %s1, %s250
          %s252 = scalar_lea.vmem [#allocation2], 4
          // Predicated region
          $region57: #{tpu_custom_call.1} parent=39 // pred_check
            _
          $region58: #{tpu_custom_call.1} parent=39 // pred_check_branch
            %254 = sbr.rel target = $region60
          $region59: #{tpu_custom_call.1} parent=39 // pred_region
            %255 = sst [smem:[#allocation12]] [#allocation21]
            %256 = sst [smem:[#allocation13]] [#allocation20]
          $region60: #{tpu_custom_call.1} parent=39 // pred_fallthru
            _
          %258 = shalt.err (0)
          %s260 = sshll.u32 %s252, 4
          %s261 = int_to_ptr.vmem [resolvable:$true] %s260
          %263 = dma.hbm_to_vmem [thread:$0]  %s251, 16, %s261, [#allocation3]
          %s264 = smul.addr %s192, 16
          %s265 = scalar_lea.hbm %s1, %s264
          %s266 = scalar_lea.vmem [#allocation2], 5
          // Predicated region
          $region61: #{tpu_custom_call.1} parent=39 // pred_check
            _
          $region62: #{tpu_custom_call.1} parent=39 // pred_check_branch
            %268 = sbr.rel target = $region64
          $region63: #{tpu_custom_call.1} parent=39 // pred_region
            %269 = sst [smem:[#allocation12]] [#allocation23]
            %270 = sst [smem:[#allocation13]] [#allocation22]
          $region64: #{tpu_custom_call.1} parent=39 // pred_fallthru
            _
          %272 = shalt.err (0)
          %s274 = sshll.u32 %s266, 4
          %s275 = int_to_ptr.vmem [resolvable:$true] %s274
          %277 = dma.hbm_to_vmem [thread:$0]  %s265, 16, %s275, [#allocation3]
          %s278 = smul.addr %s193, 16
          %s279 = scalar_lea.hbm %s1, %s278
          %s280 = scalar_lea.vmem [#allocation2], 6
          // Predicated region
          $region65: #{tpu_custom_call.1} parent=39 // pred_check
            _
          $region66: #{tpu_custom_call.1} parent=39 // pred_check_branch
            %282 = sbr.rel target = $region68
          $region67: #{tpu_custom_call.1} parent=39 // pred_region
            %283 = sst [smem:[#allocation12]] [#allocation25]
            %284 = sst [smem:[#allocation13]] [#allocation24]
          $region68: #{tpu_custom_call.1} parent=39 // pred_fallthru
            _
          %286 = shalt.err (0)
          %s288 = sshll.u32 %s280, 4
          %s289 = int_to_ptr.vmem [resolvable:$true] %s288
          %291 = dma.hbm_to_vmem [thread:$0]  %s279, 16, %s289, [#allocation3]
          %s292 = smul.addr %s194, 16
          %s293 = scalar_lea.hbm %s1, %s292
          %s294 = scalar_lea.vmem [#allocation2], 7
          // Predicated region
          $region69: #{tpu_custom_call.1} parent=39 // pred_check
            _
          $region70: #{tpu_custom_call.1} parent=39 // pred_check_branch
            %296 = sbr.rel target = $region72
          $region71: #{tpu_custom_call.1} parent=39 // pred_region
            %297 = sst [smem:[#allocation12]] [#allocation27]
            %298 = sst [smem:[#allocation13]] [#allocation26]
          $region72: #{tpu_custom_call.1} parent=39 // pred_fallthru
            _
          %300 = shalt.err (0)
          %s302 = sshll.u32 %s294, 4
          %s303 = int_to_ptr.vmem [resolvable:$true] %s302
          %305 = dma.hbm_to_vmem [thread:$0]  %s293, 16, %s303, [#allocation3]
          %s306 = sld [smem:[#allocation5 + $0x8]]
          %s307 = sld [smem:[#allocation5 + $0x9]]
          %s308 = sld [smem:[#allocation5 + $0xa]]
          %s309 = sld [smem:[#allocation5 + $0xb]]
          %s310 = sld [smem:[#allocation5 + $0xc]]
          %s311 = sld [smem:[#allocation5 + $0xd]]
          %s312 = sld [smem:[#allocation5 + $0xe]]
          %s313 = sld [smem:[#allocation5 + $0xf]]
          %s314 = smul.addr %s306, 16
          %s315 = scalar_lea.hbm %s1, %s314
          %s316 = scalar_lea.vmem [#allocation2], 8
          %s317 = scalar_lea.sflag [#allocation3], 1
          // Predicated region
          $region73: #{tpu_custom_call.1} parent=39 // pred_check
            _
          $region74: #{tpu_custom_call.1} parent=39 // pred_check_branch
            %319 = sbr.rel target = $region76
          $region75: #{tpu_custom_call.1} parent=39 // pred_region
            %320 = sst [smem:[#allocation12]] [#allocation29]
            %321 = sst [smem:[#allocation13]] [#allocation28]
          $region76: #{tpu_custom_call.1} parent=39 // pred_fallthru
            _
          %323 = shalt.err (0)
          %s325 = sshll.u32 %s316, 4
          %s326 = int_to_ptr.vmem [resolvable:$true] %s325
          %328 = dma.hbm_to_vmem [thread:$0]  %s315, 16, %s326, %s317
          %s329 = smul.addr %s307, 16
          %s330 = scalar_lea.hbm %s1, %s329
          %s331 = scalar_lea.vmem [#allocation2], 9
          // Predicated region
          $region77: #{tpu_custom_call.1} parent=39 // pred_check
            _
          $region78: #{tpu_custom_call.1} parent=39 // pred_check_branch
            %333 = sbr.rel target = $region80
          $region79: #{tpu_custom_call.1} parent=39 // pred_region
            %334 = sst [smem:[#allocation12]] [#allocation31]
            %335 = sst [smem:[#allocation13]] [#allocation30]
          $region80: #{tpu_custom_call.1} parent=39 // pred_fallthru
            _
          %337 = shalt.err (0)
          %s339 = sshll.u32 %s331, 4
          %s340 = int_to_ptr.vmem [resolvable:$true] %s339
          %342 = dma.hbm_to_vmem [thread:$0]  %s330, 16, %s340, %s317
          %s343 = smul.addr %s308, 16
          %s344 = scalar_lea.hbm %s1, %s343
          %s345 = scalar_lea.vmem [#allocation2], 10
          // Predicated region
          $region81: #{tpu_custom_call.1} parent=39 // pred_check
            _
          $region82: #{tpu_custom_call.1} parent=39 // pred_check_branch
            %347 = sbr.rel target = $region84
          $region83: #{tpu_custom_call.1} parent=39 // pred_region
            %348 = sst [smem:[#allocation12]] [#allocation33]
            %349 = sst [smem:[#allocation13]] [#allocation32]
          $region84: #{tpu_custom_call.1} parent=39 // pred_fallthru
            _
          %351 = shalt.err (0)
          %s353 = sshll.u32 %s345, 4
          %s354 = int_to_ptr.vmem [resolvable:$true] %s353
          %356 = dma.hbm_to_vmem [thread:$0]  %s344, 16, %s354, %s317
          %s357 = smul.addr %s309, 16
          %s358 = scalar_lea.hbm %s1, %s357
          %s359 = scalar_lea.vmem [#allocation2], 11
          // Predicated region
          $region85: #{tpu_custom_call.1} parent=39 // pred_check
            _
          $region86: #{tpu_custom_call.1} parent=39 // pred_check_branch
            %361 = sbr.rel target = $region88
          $region87: #{tpu_custom_call.1} parent=39 // pred_region
            %362 = sst [smem:[#allocation12]] [#allocation35]
            %363 = sst [smem:[#allocation13]] [#allocation34]
          $region88: #{tpu_custom_call.1} parent=39 // pred_fallthru
            _
          %365 = shalt.err (0)
          %s367 = sshll.u32 %s359, 4
          %s368 = int_to_ptr.vmem [resolvable:$true] %s367
          %370 = dma.hbm_to_vmem [thread:$0]  %s358, 16, %s368, %s317
          %s371 = smul.addr %s310, 16
          %s372 = scalar_lea.hbm %s1, %s371
          %s373 = scalar_lea.vmem [#allocation2], 12
          // Predicated region
          $region89: #{tpu_custom_call.1} parent=39 // pred_check
            _
          $region90: #{tpu_custom_call.1} parent=39 // pred_check_branch
            %375 = sbr.rel target = $region92
          $region91: #{tpu_custom_call.1} parent=39 // pred_region
            %376 = sst [smem:[#allocation12]] [#allocation37]
            %377 = sst [smem:[#allocation13]] [#allocation36]
          $region92: #{tpu_custom_call.1} parent=39 // pred_fallthru
            _
          %379 = shalt.err (0)
          %s381 = sshll.u32 %s373, 4
          %s382 = int_to_ptr.vmem [resolvable:$true] %s381
          %384 = dma.hbm_to_vmem [thread:$0]  %s372, 16, %s382, %s317
          %s385 = smul.addr %s311, 16
          %s386 = scalar_lea.hbm %s1, %s385
          %s387 = scalar_lea.vmem [#allocation2], 13
          // Predicated region
          $region93: #{tpu_custom_call.1} parent=39 // pred_check
            _
          $region94: #{tpu_custom_call.1} parent=39 // pred_check_branch
            %389 = sbr.rel target = $region96
          $region95: #{tpu_custom_call.1} parent=39 // pred_region
            %390 = sst [smem:[#allocation12]] [#allocation39]
            %391 = sst [smem:[#allocation13]] [#allocation38]
          $region96: #{tpu_custom_call.1} parent=39 // pred_fallthru
            _
          %393 = shalt.err (0)
          %s395 = sshll.u32 %s387, 4
          %s396 = int_to_ptr.vmem [resolvable:$true] %s395
          %398 = dma.hbm_to_vmem [thread:$0]  %s386, 16, %s396, %s317
          %s399 = smul.addr %s312, 16
          %s400 = scalar_lea.hbm %s1, %s399
          %s401 = scalar_lea.vmem [#allocation2], 14
          // Predicated region
          $region97: #{tpu_custom_call.1} parent=39 // pred_check
            _
          $region98: #{tpu_custom_call.1} parent=39 // pred_check_branch
            %403 = sbr.rel target = $region100
          $region99: #{tpu_custom_call.1} parent=39 // pred_region
            %404 = sst [smem:[#allocation12]] [#allocation41]
            %405 = sst [smem:[#allocation13]] [#allocation40]
          $region100: #{tpu_custom_call.1} parent=39 // pred_fallthru
            _
          %407 = shalt.err (0)
          %s409 = sshll.u32 %s401, 4
          %s410 = int_to_ptr.vmem [resolvable:$true] %s409
          %412 = dma.hbm_to_vmem [thread:$0]  %s400, 16, %s410, %s317
          %s413 = smul.addr %s313, 16
          %s414 = scalar_lea.hbm %s1, %s413
          %s415 = scalar_lea.vmem [#allocation2], 15
          // Predicated region
          $region101: #{tpu_custom_call.1} parent=39 // pred_check
            _
          $region102: #{tpu_custom_call.1} parent=39 // pred_check_branch
            %417 = sbr.rel target = $region104
          $region103: #{tpu_custom_call.1} parent=39 // pred_region
            %418 = sst [smem:[#allocation12]] [#allocation43]
            %419 = sst [smem:[#allocation13]] [#allocation42]
          $region104: #{tpu_custom_call.1} parent=39 // pred_fallthru
            _
          %421 = shalt.err (0)
          %s423 = sshll.u32 %s415, 4
          %s424 = int_to_ptr.vmem [resolvable:$true] %s423
          %426 = dma.hbm_to_vmem [thread:$0]  %s414, 16, %s424, %s317
        $region40: #{tpu_custom_call.1} parent=31 // pred_fallthru
          _
        %s427 = sadd.s32 %s24, 2
        %p428 = scmp.lt.s32.totalorder %s427, 2
        // Predicated region
        $region105: #{tpu_custom_call.1} parent=31 // pred_check
          %p429 = pneg %p428
        $region106: #{tpu_custom_call.1} parent=31 // pred_check_branch
          %431 = sbr.rel (%p429) target = $region108
        $region107: #{tpu_custom_call.1} parent=31 // pred_region
          %p432 = scmp.lt.s32.totalorder %s427, 0
          %s433 = ssub.s32 0, %s427
          %s434 = scalar_select %p432, %s433, %s427
          %s435 = sdiv.u32.pop %s434, 3
          %s436 = srem.u32.pop %s434, 3
          %s437 = ssub.s32 0, %s436
          %s438 = scalar_select %p432, %s437, %s436
          %p439 = scmp.ne.s32.totalorder %s438, 0
          %p440 = scmp.lt.s32.totalorder %s438, 0
          %p441 = pnand %p440, %p439
          %p442 = pneg %p441
          %s443 = sadd.s32 %s438, 3
          %s444 = scalar_select %p442, %s443, %s438
          %s445 = smul.u32 %s427, 8
          %s446 = smul.u32 %s444, 8
          %s447 = sld [smem:[#allocation5 + %s445]]
          %s448 = sadd.s32 %s445, 1
          %s449 = sld [smem:[#allocation5 + %s448]]
          %s450 = sadd.s32 %s445, 2
          %s451 = sld [smem:[#allocation5 + %s450]]
          %s452 = sadd.s32 %s445, 3
          %s453 = sld [smem:[#allocation5 + %s452]]
          %s454 = sadd.s32 %s445, 4
          %s455 = sld [smem:[#allocation5 + %s454]]
          %s456 = sadd.s32 %s445, 5
          %s457 = sld [smem:[#allocation5 + %s456]]
          %s458 = sadd.s32 %s445, 6
          %s459 = sld [smem:[#allocation5 + %s458]]
          %s460 = sadd.s32 %s445, 7
          %s461 = sld [smem:[#allocation5 + %s460]]
          %s462 = smul.addr %s447, 16
          %s463 = scalar_lea.hbm %s1, %s462
          %s464 = scalar_lea.vmem [#allocation2], %s446
          %s465 = scalar_lea.sflag [#allocation3], %s444
          // Predicated region
          $region109: #{tpu_custom_call.1} parent=107 // pred_check
            _
          $region110: #{tpu_custom_call.1} parent=107 // pred_check_branch
            %467 = sbr.rel target = $region112
          $region111: #{tpu_custom_call.1} parent=107 // pred_region
            %468 = sst [smem:[#allocation12]] [#allocation45]
            %469 = sst [smem:[#allocation13]] [#allocation44]
          $region112: #{tpu_custom_call.1} parent=107 // pred_fallthru
            _
          %471 = shalt.err (0)
          %s473 = sshll.u32 %s464, 4
          %s474 = int_to_ptr.vmem [resolvable:$true] %s473
          %476 = dma.hbm_to_vmem [thread:$0]  %s463, 16, %s474, %s465
          %s477 = sadd.s32 %s446, 1
          %s478 = smul.addr %s449, 16
          %s479 = scalar_lea.hbm %s1, %s478
          %s480 = scalar_lea.vmem [#allocation2], %s477
          // Predicated region
          $region113: #{tpu_custom_call.1} parent=107 // pred_check
            _
          $region114: #{tpu_custom_call.1} parent=107 // pred_check_branch
            %482 = sbr.rel target = $region116
          $region115: #{tpu_custom_call.1} parent=107 // pred_region
            %483 = sst [smem:[#allocation12]] [#allocation47]
            %484 = sst [smem:[#allocation13]] [#allocation46]
          $region116: #{tpu_custom_call.1} parent=107 // pred_fallthru
            _
          %486 = shalt.err (0)
          %s488 = sshll.u32 %s480, 4
          %s489 = int_to_ptr.vmem [resolvable:$true] %s488
          %491 = dma.hbm_to_vmem [thread:$0]  %s479, 16, %s489, %s465
          %s492 = sadd.s32 %s446, 2
          %s493 = smul.addr %s451, 16
          %s494 = scalar_lea.hbm %s1, %s493
          %s495 = scalar_lea.vmem [#allocation2], %s492
          // Predicated region
          $region117: #{tpu_custom_call.1} parent=107 // pred_check
            _
          $region118: #{tpu_custom_call.1} parent=107 // pred_check_branch
            %497 = sbr.rel target = $region120
          $region119: #{tpu_custom_call.1} parent=107 // pred_region
            %498 = sst [smem:[#allocation12]] [#allocation49]
            %499 = sst [smem:[#allocation13]] [#allocation48]
          $region120: #{tpu_custom_call.1} parent=107 // pred_fallthru
            _
          %501 = shalt.err (0)
          %s503 = sshll.u32 %s495, 4
          %s504 = int_to_ptr.vmem [resolvable:$true] %s503
          %506 = dma.hbm_to_vmem [thread:$0]  %s494, 16, %s504, %s465
          %s507 = sadd.s32 %s446, 3
          %s508 = smul.addr %s453, 16
          %s509 = scalar_lea.hbm %s1, %s508
          %s510 = scalar_lea.vmem [#allocation2], %s507
          // Predicated region
          $region121: #{tpu_custom_call.1} parent=107 // pred_check
            _
          $region122: #{tpu_custom_call.1} parent=107 // pred_check_branch
            %512 = sbr.rel target = $region124
          $region123: #{tpu_custom_call.1} parent=107 // pred_region
            %513 = sst [smem:[#allocation12]] [#allocation51]
            %514 = sst [smem:[#allocation13]] [#allocation50]
          $region124: #{tpu_custom_call.1} parent=107 // pred_fallthru
            _
          %516 = shalt.err (0)
          %s518 = sshll.u32 %s510, 4
          %s519 = int_to_ptr.vmem [resolvable:$true] %s518
          %521 = dma.hbm_to_vmem [thread:$0]  %s509, 16, %s519, %s465
          %s522 = sadd.s32 %s446, 4
          %s523 = smul.addr %s455, 16
          %s524 = scalar_lea.hbm %s1, %s523
          %s525 = scalar_lea.vmem [#allocation2], %s522
          // Predicated region
          $region125: #{tpu_custom_call.1} parent=107 // pred_check
            _
          $region126: #{tpu_custom_call.1} parent=107 // pred_check_branch
            %527 = sbr.rel target = $region128
          $region127: #{tpu_custom_call.1} parent=107 // pred_region
            %528 = sst [smem:[#allocation12]] [#allocation53]
            %529 = sst [smem:[#allocation13]] [#allocation52]
          $region128: #{tpu_custom_call.1} parent=107 // pred_fallthru
            _
          %531 = shalt.err (0)
          %s533 = sshll.u32 %s525, 4
          %s534 = int_to_ptr.vmem [resolvable:$true] %s533
          %536 = dma.hbm_to_vmem [thread:$0]  %s524, 16, %s534, %s465
          %s537 = sadd.s32 %s446, 5
          %s538 = smul.addr %s457, 16
          %s539 = scalar_lea.hbm %s1, %s538
          %s540 = scalar_lea.vmem [#allocation2], %s537
          // Predicated region
          $region129: #{tpu_custom_call.1} parent=107 // pred_check
            _
          $region130: #{tpu_custom_call.1} parent=107 // pred_check_branch
            %542 = sbr.rel target = $region132
          $region131: #{tpu_custom_call.1} parent=107 // pred_region
            %543 = sst [smem:[#allocation12]] [#allocation55]
            %544 = sst [smem:[#allocation13]] [#allocation54]
          $region132: #{tpu_custom_call.1} parent=107 // pred_fallthru
            _
          %546 = shalt.err (0)
          %s548 = sshll.u32 %s540, 4
          %s549 = int_to_ptr.vmem [resolvable:$true] %s548
          %551 = dma.hbm_to_vmem [thread:$0]  %s539, 16, %s549, %s465
          %s552 = sadd.s32 %s446, 6
          %s553 = smul.addr %s459, 16
          %s554 = scalar_lea.hbm %s1, %s553
          %s555 = scalar_lea.vmem [#allocation2], %s552
          // Predicated region
          $region133: #{tpu_custom_call.1} parent=107 // pred_check
            _
          $region134: #{tpu_custom_call.1} parent=107 // pred_check_branch
            %557 = sbr.rel target = $region136
          $region135: #{tpu_custom_call.1} parent=107 // pred_region
            %558 = sst [smem:[#allocation12]] [#allocation57]
            %559 = sst [smem:[#allocation13]] [#allocation56]
          $region136: #{tpu_custom_call.1} parent=107 // pred_fallthru
            _
          %561 = shalt.err (0)
          %s563 = sshll.u32 %s555, 4
          %s564 = int_to_ptr.vmem [resolvable:$true] %s563
          %566 = dma.hbm_to_vmem [thread:$0]  %s554, 16, %s564, %s465
          %s567 = sadd.s32 %s446, 7
          %s568 = smul.addr %s461, 16
          %s569 = scalar_lea.hbm %s1, %s568
          %s570 = scalar_lea.vmem [#allocation2], %s567
          // Predicated region
          $region137: #{tpu_custom_call.1} parent=107 // pred_check
            _
          $region138: #{tpu_custom_call.1} parent=107 // pred_check_branch
            %572 = sbr.rel target = $region140
          $region139: #{tpu_custom_call.1} parent=107 // pred_region
            %573 = sst [smem:[#allocation12]] [#allocation59]
            %574 = sst [smem:[#allocation13]] [#allocation58]
          $region140: #{tpu_custom_call.1} parent=107 // pred_fallthru
            _
          %576 = shalt.err (0)
          %s578 = sshll.u32 %s570, 4
          %s579 = int_to_ptr.vmem [resolvable:$true] %s578
          %581 = dma.hbm_to_vmem [thread:$0]  %s569, 16, %s579, %s465
        $region108: #{tpu_custom_call.1} parent=31 // pred_fallthru
          _
        %s582 = smul.u32 %s182, 8
        %s583 = scalar_lea.sflag [#allocation3], %s182
        %s584 = smul.u32 8, 1
        %s585 = sshll.u32 %s584, 4
        %586 = dma.done %s583, %s585
        %s587 = scalar_lea.vmem [#allocation2], %s582
        %v588 = vld [vmem:[%s587] sm:$0xff]
        %v589 = vld [vmem:[#allocation6] sm:$0xff]
        %v590 = vadd.f32 %v588, %v589
        %591 = vadd.xlane.f32.xlu0 %v590
        %v592 = vpop.xlane.xlu0 %591
        %v593 = vmul.f32 %v592, 0.0078125
        %v594 = vsub.f32 %v590, %v593
        %v595 = vmul.f32 %v594, %v594
        %596 = vadd.xlane.f32.xlu0 %v595
        %v597 = vpop.xlane.xlu0 %596
        %v598 = vmul.f32 %v597, 0.0078125
        %v599 = vadd.f32 %v598, 1e-12
        %v600 = vrsqrt.pop %v599
        %v601 = vmul.f32 %v594, %v600
        %v602 = vld [vmem:[%s3] sm:$0x1]
        %v604 = vlaneseq
        %v605 = vshrl.u32 %v604, 7
        %v606 = vsub.s32 0, %v605
        %v607 = vrot.slane %v602, %v606
        %v609 = vmul.f32 %v601, %v607
        %v610 = vld [vmem:[%s4] sm:$0x1]
        %v612 = vlaneseq
        %v613 = vshrl.u32 %v612, 7
        %v614 = vsub.s32 0, %v613
        %v615 = vrot.slane %v610, %v614
        %v617 = vadd.f32 %v609, %v615
        %618 = vst [vmem:[%s169] sm:$0xff] %v617
        %s619 = sand.u32 %s95, 1
        %s620 = scalar_lea.sflag [#allocation8], %s619
        %s621 = sand.u32 %s95, 1
        %s622 = smul.addr %s621, 8
        %s623 = scalar_lea.vmem [#allocation9], %s622
        // Predicated region
        $region141: #{tpu_custom_call.1} parent=31 // pred_check
          %p624 = pneg %p105
        $region142: #{tpu_custom_call.1} parent=31 // pred_check_branch
          %626 = sbr.rel (%p624) target = $region144
        $region143: #{tpu_custom_call.1} parent=31 // pred_region
          %s628 = ssub.s32 128, 128
          %629 = vsyncadd %s620, %s628
          %s630 = smul.addr %s24, 128
          %s631 = scalar_lea.hbm %s5, %s630
          %s633 = sshll.u32 %s623, 4
          %s634 = int_to_ptr.vmem [resolvable:$true] %s633
          %636 = dma.vmem_to_hbm [thread:$0]  %s634, 128, %s631, %s620
        $region144: #{tpu_custom_call.1} parent=31 // pred_fallthru
          _
      $region32: #{tpu_custom_call.1} parent=5 // pred_fallthru
        _
      %p637 = scmp.le.s32.totalorder 2, %s19
      // Predicated region
      $region145: #{tpu_custom_call.1} parent=5 // pred_check
        %p638 = pneg %p637
      $region146: #{tpu_custom_call.1} parent=5 // pred_check_branch
        %640 = sbr.rel (%p638) target = $region148
      $region147: #{tpu_custom_call.1} parent=5 // pred_region
        %s641 = ssub.s32 %s19, 2
        // Predicated region
        $region149: #{tpu_custom_call.1} parent=147 // pred_check
          %p642 = pneg %p111
        $region150: #{tpu_custom_call.1} parent=147 // pred_check_branch
          %644 = sbr.rel (%p642) target = $region152
        $region151: #{tpu_custom_call.1} parent=147 // pred_region
          %s645 = sand.u32 %s96, 1
          %s646 = scalar_lea.sflag [#allocation8], %s645
          %s647 = sand.u32 %s96, 1
          %s648 = smul.addr %s647, 8
          %s649 = scalar_lea.vmem [#allocation9], %s648
          %650 = dma.done %s646, 128
        $region152: #{tpu_custom_call.1} parent=147 // pred_fallthru
          _
      $region148: #{tpu_custom_call.1} parent=5 // pred_fallthru
        _
    $region6: #{tpu_custom_call.1} parent=1 // loop_footer
      %s23 = sadd.s32 1, %s19
    $region7: #{tpu_custom_call.1} parent=1 // loop_footer_branch
      %18 = sbr.rel target = $region3
    $region8: #{tpu_custom_call.1} parent=1 // loop_exit
      _
    %651 = vsyncpa [#allocation7], 1
    %s652 = scalar_lea.sflag [#allocation7], 1
    %653 = vsyncpa %s652, 1
    %654 = vsyncpa [#allocation8], 1
    %s655 = scalar_lea.sflag [#allocation8], 1
    %656 = vsyncpa %s655, 1
  %657 = vsyncmov [#allocation3]
  %s658 = vpop.sfrf %657
  %p659 = scmp.eq.s32.totalorder %s658, 0
  %p660 = pneg %p659
  %662 = shalt.err (%p660)
  %s663 = scalar_lea.sflag [#allocation3], 1
  %664 = vsyncmov %s663
  %s665 = vpop.sfrf %664
  %p666 = scmp.eq.s32.totalorder %s665, 0
  %p667 = pneg %p666
  %669 = shalt.err (%p667)
  %s670 = scalar_lea.sflag [#allocation3], 2
  %671 = vsyncmov %s670
  %s672 = vpop.sfrf %671
  %p673 = scmp.eq.s32.totalorder %s672, 0
  %p674 = pneg %p673
  %676 = shalt.err (%p674)

</llo_original>
